<compile_context>
chip_gen: v6e
topology: v6e:2x2x1
jax: 0.10.0
libtpu: 0.0.40
codegen_flags: <defaults>
</compile_context>

<pallas_src>
import functools
import math

import jax
import jax.numpy as jnp
from jax.experimental import pallas as pl
from jax.experimental.pallas import tpu as pltpu


# ----------------------------------------------------------------------------
# Shared bi-LSTM + mean-over-time helper (traced inside both kernels)
# ----------------------------------------------------------------------------
def _bilstm_mean(x2, w_ih_ref, w_hh_ref, b_ref, seq_len, n_nodes, hid):
    """Bidirectional single-layer LSTM (PyTorch gate order i,f,g,o) + time mean.

    x2:        (seq_len * n_nodes, D) time-major rows (any float dtype).
    w_ih_ref:  (D, 8*hid) bf16, columns grouped [fw i,f,g,o | bw i,f,g,o].
    w_hh_ref:  (8, hid, hid) bf16, leading index = dir*4 + gate.
    b_ref:     (1, 8*hid) f32 (b_ih + b_hh), same column grouping as w_ih.
    returns    (n_nodes, 2*hid) f32 == mean_t([h_fw(t) | h_bw(t)]).
    """
    x2b = x2.astype(jnp.bfloat16)

    # Hoisted input projection: a single wide MXU matmul covering both
    # directions and all four gates, bias added once.  The per-(dir, gate)
    # lane slices are also hoisted -- only the h @ W_hh matmuls remain on the
    # serial recurrence path.
    gx_all = jnp.dot(x2b, w_ih_ref[...], preferred_element_type=jnp.float32)
    gx_all = gx_all + b_ref[...]
    gx = [[gx_all[:, (d * 4 + g) * hid:(d * 4 + g + 1) * hid] for g in range(4)]
          for d in range(2)]

    zeros = jnp.zeros((n_nodes, hid), jnp.float32)
    h_f, c_f, acc_f = zeros, zeros, zeros
    h_b, c_b, acc_b = zeros, zeros, zeros

    def cell(h, c, gx_d, w_base, t):
        hb = h.astype(jnp.bfloat16)
        lo, hi = t * n_nodes, (t + 1) * n_nodes        # static sublane slice
        g_i = gx_d[0][lo:hi] + jnp.dot(hb, w_hh_ref[w_base + 0],
                                       preferred_element_type=jnp.float32)
        g_f = gx_d[1][lo:hi] + jnp.dot(hb, w_hh_ref[w_base + 1],
                                       preferred_element_type=jnp.float32)
        g_g = gx_d[2][lo:hi] + jnp.dot(hb, w_hh_ref[w_base + 2],
                                       preferred_element_type=jnp.float32)
        g_o = gx_d[3][lo:hi] + jnp.dot(hb, w_hh_ref[w_base + 3],
                                       preferred_element_type=jnp.float32)
        i_t = jax.nn.sigmoid(g_i)
        f_t = jax.nn.sigmoid(g_f)
        g_t = jnp.tanh(g_g)
        o_t = jax.nn.sigmoid(g_o)
        c = f_t * c + i_t * g_t
        h = o_t * jnp.tanh(c)
        return h, c

    # Interleave the two independent recurrences in one unrolled loop.
    for s in range(seq_len):
        h_f, c_f = cell(h_f, c_f, gx[0], 0, s)
        h_b, c_b = cell(h_b, c_b, gx[1], 4, seq_len - 1 - s)
        acc_f = acc_f + h_f
        acc_b = acc_b + h_b

    inv_t = 1.0 / seq_len
    return jnp.concatenate([acc_f * inv_t, acc_b * inv_t], axis=1)


# ----------------------------------------------------------------------------
# Kernel 1: fused content encoders (C2), grid over ntype
# ----------------------------------------------------------------------------
def _content_lstm_kernel(x_ref, w_ih_ref, w_hh_ref, b_ref, o_ref,
                         *, seq_len, n_nodes, hid):
    o_ref[...] = _bilstm_mean(x_ref[...], w_ih_ref, w_hh_ref, b_ref,
                              seq_len, n_nodes, hid).astype(o_ref.dtype)


def content_lstm(content_seq, w_ih, w_hh, b, *, n_nodes, hid):
    n_types, tn, dim = content_seq.shape
    seq_len = tn // n_nodes
    kern = functools.partial(_content_lstm_kernel,
                             seq_len=seq_len, n_nodes=n_nodes, hid=hid)
    return pl.pallas_call(
        kern,
        out_shape=jax.ShapeDtypeStruct((n_types, n_nodes, dim), jnp.float32),
        grid=(n_types,),
        in_specs=[
            pl.BlockSpec((None, tn, dim), lambda i: (i, 0, 0)),
            pl.BlockSpec((None, dim, 8 * hid), lambda i: (i, 0, 0)),
            pl.BlockSpec((None, 8, hid, hid), lambda i: (i, 0, 0, 0)),
            pl.BlockSpec((None, 1, 8 * hid), lambda i: (i, 0, 0)),
        ],
        out_specs=pl.BlockSpec((None, n_nodes, dim), lambda i: (i, 0, 0)),
        compiler_params=pltpu.CompilerParams(
            dimension_semantics=("parallel",)),
    )(content_seq, w_ih, w_hh, b)


# ----------------------------------------------------------------------------
# Kernel 2: fused neighbor bi-LSTM aggregation (C3) + attention combine,
#           grid = (dtype, stype); attention runs at the last stype step.
# ----------------------------------------------------------------------------
def _neigh_atten_kernel(nbr_ref, w_ih_ref, w_hh_ref, b_ref,
                        dh_ref, aw_ref, ab_ref, o_ref, emds_ref,
                        *, seq_len, n_nodes, hid):
    st = pl.program_id(1)
    last_st = pl.num_programs(1) - 1

    neigh = _bilstm_mean(nbr_ref[...], w_ih_ref, w_hh_ref, b_ref,
                         seq_len, n_nodes, hid)
    emds_ref[st] = neigh                       # slot per stype in the VMEM slab

    @pl.when(st == last_st)
    def _():
        d_h = dh_ref[...]                      # (N, D) content of the dst type
        emds_ref[emds_ref.shape[0] - 1] = d_h  # self-embedding slot
        emds = emds_ref[...]                   # (P, N, D) with P = n_stypes + 1

        w_dst = aw_ref[0:1, :]                 # (1, D) -> multiplies d_h
        w_emd = aw_ref[1:2, :]                 # (1, D) -> multiplies each emd
        # scores[p, n] = w_dst . d_h[n] + w_emd . emds[p, n] + bias
        scores = jnp.sum(emds * w_emd[None, :, :]
                         + d_h[None, :, :] * w_dst[None, :, :],
                         axis=2) + ab_ref[...]                       # (P, N)
        # LeakyReLU (PyTorch default negative_slope = 0.01)
        scores = jnp.where(scores >= 0.0, scores, 0.01 * scores)
        # softmax over the P candidates
        m = jnp.max(scores, axis=0, keepdims=True)
        e = jnp.exp(scores - m)
        attn = e / jnp.sum(e, axis=0, keepdims=True)                 # (P, N)
        # bmm((N,1,P),(N,P,D)) -> (N,D)
        out = jnp.sum(attn[:, :, None] * emds, axis=0)
        o_ref[...] = out.astype(o_ref.dtype)


def neigh_attention(nbr_seq, w_ih, w_hh, b, content_h, atten_w, atten_b,
                    *, n_nodes, hid):
    n_dt, n_st, kn, dim = nbr_seq.shape
    seq_len = kn // n_nodes
    kern = functools.partial(_neigh_atten_kernel,
                             seq_len=seq_len, n_nodes=n_nodes, hid=hid)
    return pl.pallas_call(
        kern,
        out_shape=jax.ShapeDtypeStruct((n_dt, n_nodes, dim), jnp.float32),
        grid=(n_dt, n_st),
        in_specs=[
            pl.BlockSpec((None, None, kn, dim), lambda dt, st: (dt, st, 0, 0)),
            pl.BlockSpec((None, dim, 8 * hid), lambda dt, st: (st, 0, 0)),
            pl.BlockSpec((None, 8, hid, hid), lambda dt, st: (st, 0, 0, 0)),
            pl.BlockSpec((None, 1, 8 * hid), lambda dt, st: (st, 0, 0)),
            pl.BlockSpec((None, n_nodes, dim), lambda dt, st: (dt, 0, 0)),
            pl.BlockSpec((None, 2, dim), lambda dt, st: (dt, 0, 0)),
            pl.BlockSpec((None, 1, 1), lambda dt, st: (dt, 0, 0)),
        ],
        out_specs=pl.BlockSpec((None, n_nodes, dim), lambda dt, st: (dt, 0, 0)),
        scratch_shapes=[pltpu.VMEM((n_st + 1, n_nodes, dim), jnp.float32)],
        compiler_params=pltpu.CompilerParams(
            dimension_semantics=("parallel", "arbitrary")),
    )(nbr_seq, w_ih, w_hh, b, content_h, atten_w, atten_b)


# ----------------------------------------------------------------------------
# Parameter construction (PyTorch-shaped init, then re-packed for the kernels)
# ----------------------------------------------------------------------------
def init_lstm_params(key, dim):
    """nn.LSTM(dim, dim//2, 1, bidirectional=True) params, re-packed:
       w_ih (dim, 8H) bf16 columns [fw i,f,g,o | bw i,f,g,o],
       w_hh (8, H, H) bf16 indexed by dir*4 + gate,
       b    (1, 8H) f32 = b_ih + b_hh, same column layout as w_ih."""
    H = dim // 2
    k = 1.0 / math.sqrt(H)
    ks = jax.random.split(key, 8)
    u = lambda kk, s: jax.random.uniform(kk, s, jnp.float32, -k, k)
    w_ih_f, w_hh_f = u(ks[0], (4 * H, dim)), u(ks[1], (4 * H, H))
    b_ih_f, b_hh_f = u(ks[2], (4 * H,)), u(ks[3], (4 * H,))
    w_ih_b, w_hh_b = u(ks[4], (4 * H, dim)), u(ks[5], (4 * H, H))
    b_ih_b, b_hh_b = u(ks[6], (4 * H,)), u(ks[7], (4 * H,))

    def per_gate(w):  # (4H, in) -> list of 4 pre-transposed (in, H), order i,f,g,o
        return [w[g * H:(g + 1) * H, :].T for g in range(4)]

    w_ih = jnp.concatenate(per_gate(w_ih_f) + per_gate(w_ih_b), axis=1)  # (dim, 8H)
    w_hh = jnp.stack(per_gate(w_hh_f) + per_gate(w_hh_b), axis=0)        # (8, H, H)
    bias = jnp.concatenate([b_ih_f + b_hh_f, b_ih_b + b_hh_b]
                           ).reshape(1, 8 * H)                           # (1, 8H)
    return w_ih.astype(jnp.bfloat16), w_hh.astype(jnp.bfloat16), bias


def init_linear_params(key, dim):
    """nn.Linear(2*dim, 1) -> weight split into (2, dim) [dst half; emd half], bias (1,1)."""
    k = 1.0 / math.sqrt(2 * dim)
    k1, k2 = jax.random.split(key)
    weight = jax.random.uniform(k1, (1, 2 * dim), jnp.float32, -k, k)
    bias = jax.random.uniform(k2, (1,), jnp.float32, -k, k)
    w = jnp.concatenate([weight[:, :dim], weight[:, dim:]], axis=0)   # (2, dim)
    return w, bias.reshape(1, 1)


# ----------------------------------------------------------------------------
# Full forward (mirrors Het_Aggregate.forward)
# ----------------------------------------------------------------------------
def het_aggregate_forward(h_dict, nbr_idx, params, ntypes, dim):
    hid = dim // 2
    n_nodes = next(iter(h_dict[ntypes[0]].values())).shape[0]

    # C2: encoder_het_content - per-ntype content LSTM + mean, one fused call.
    # Sequences pre-cast to bf16 (they only feed bf16 MXU operands) to halve
    # the activation DMA; all accumulation stays f32 inside the kernel.
    seqs = []
    for n in ntypes:
        feats = [h_dict[n][name] for name in h_dict[n]]
        concat = jnp.concatenate(feats, axis=1)                  # (N, T*dim)
        seq = concat.reshape(n_nodes, -1, dim)                   # (N, T, dim)
        seq = jnp.transpose(seq, (1, 0, 2)).reshape(-1, dim)     # time-major (T*N, dim)
        seqs.append(seq)
    content_seq = jnp.stack(seqs, axis=0).astype(jnp.bfloat16)   # (n_types, T*N, dim)
    content_h = content_lstm(content_seq, *params["content"],
                             n_nodes=n_nodes, hid=hid)           # (n_types, N, dim) f32

    # C3 message gather (plain-JAX glue between the two kernels).
    # TODO(synk): at scale this should be a scalar-prefetched row gather inside
    # the neighbor kernel instead of an XLA gather materializing HBM traffic.
    content_h_b = content_h.astype(jnp.bfloat16)
    K = next(iter(nbr_idx.values())).shape[1]
    blocks = []
    for dt in ntypes:
        row = []
        for si, st in enumerate(ntypes):
            idx = nbr_idx[(st, dt)]                              # (N, K)
            feats = content_h_b[si][idx]                         # (N, K, dim)
            row.append(jnp.transpose(feats, (1, 0, 2)).reshape(K * n_nodes, dim))
        blocks.append(jnp.stack(row, axis=0))
    nbr_seq = jnp.stack(blocks, axis=0)                          # (n_dt, n_st, K*N, dim) bf16

    # C3 neighbor bi-LSTM + attention combine, one fused call over (dtype, stype).
    out = neigh_attention(nbr_seq, *params["neigh"], content_h,
                          params["atten_w"], params["atten_b"],
                          n_nodes=n_nodes, hid=hid)              # (n_types, N, dim)
    return {n: out[i] for i, n in enumerate(ntypes)}


# ----------------------------------------------------------------------------
if __name__ == "__main__":
    ntypes = ["author", "paper", "venue"]    # 3 ntypes -> matches hard-coded "4" = len+1
    dim = 32                                 # embed dim (hidden = 16 per direction)
    N = 8                                    # nodes per type
    K = 5                                    # fixed in-degree per relation
    n_contents = 3                           # content features per node type

    root = jax.random.PRNGKey(0)
    k_data, k_graph, k_param = jax.random.split(root, 3)

    # h_dict[ntype] = {content_name: (N, dim)}  (concatenated along dim 1)
    h_dict = {}
    dkeys = jax.random.split(k_data, len(ntypes) * n_contents)
    di = 0
    for n in ntypes:
        h_dict[n] = {}
        for c in range(n_contents):
            h_dict[n][f"{n}_feat{c}"] = jax.random.normal(
                dkeys[di], (N, dim), jnp.float32)
            di += 1

    # synthetic heterograph: every (stype -> dtype) relation, fixed in-degree K
    nbr_idx = {}
    gkeys = jax.random.split(k_graph, len(ntypes) * len(ntypes))
    gi = 0
    for dt in ntypes:
        for st in ntypes:
            nbr_idx[(st, dt)] = jax.random.randint(
                gkeys[gi], (N, K), 0, N, jnp.int32)
            gi += 1

    # parameters (deterministic), stacked along the ntype axis for batched kernels
    pkeys = jax.random.split(k_param, 3 * len(ntypes))
    content_p, neigh_p, aw_p, ab_p = [], [], [], []
    for i, n in enumerate(ntypes):
        content_p.append(init_lstm_params(pkeys[3 * i + 0], dim))
        neigh_p.append(init_lstm_params(pkeys[3 * i + 1], dim))
        w, b = init_linear_params(pkeys[3 * i + 2], dim)
        aw_p.append(w)
        ab_p.append(b)

    params = {
        "content": tuple(jnp.stack(a, axis=0) for a in zip(*content_p)),
        "neigh":   tuple(jnp.stack(a, axis=0) for a in zip(*neigh_p)),
        "atten_w": jnp.stack(aw_p, axis=0),   # (3, 2, dim)
        "atten_b": jnp.stack(ab_p, axis=0),   # (3, 1, 1)
    }

    out_h = het_aggregate_forward(h_dict, nbr_idx, params, ntypes, dim)
    out_h = jax.block_until_ready(out_h)

    for n in ntypes:
        assert out_h[n].shape == (N, dim), out_h[n].shape
        assert bool(jnp.all(jnp.isfinite(out_h[n])))
    print("KERNEL_OK")
</pallas_src>

<mosaic_0001>
module attributes {stable_mosaic.version = 11 : i64} {
  func.func @_content_lstm_kernel(%arg0: i32, %arg1: memref<1x24x32xbf16, #tpu.memory_space<vmem>>, %arg2: memref<1x32x128xbf16, #tpu.memory_space<vmem>>, %arg3: memref<1x8x16x16xbf16, #tpu.memory_space<vmem>>, %arg4: memref<1x1x128xf32, #tpu.memory_space<vmem>>, %arg5: memref<1x8x32xf32, #tpu.memory_space<vmem>>) attributes {dimension_semantics = [#tpu.dimension_semantics<parallel>], iteration_bounds = array<i64: 3>, scalar_prefetch = 0 : i64, scratch_operands = 0 : i64, tpu.core_type = #tpu.core_type<tc>, window_params = [{transform_indices = @transform_0, window_bounds = array<i64: 1, 24, 32>}, {transform_indices = @transform_1, window_bounds = array<i64: 1, 32, 128>}, {transform_indices = @transform_2, window_bounds = array<i64: 1, 8, 16, 16>}, {transform_indices = @transform_3, window_bounds = array<i64: 1, 1, 128>}, {transform_indices = @transform_4, window_bounds = array<i64: 1, 8, 32>}]} {
    %c0 = arith.constant 0 : index
    %c0_0 = arith.constant 0 : index
    %c0_1 = arith.constant 0 : index
    %0 = vector.load %arg1[%c0, %c0_0, %c0_1] : memref<1x24x32xbf16, #tpu.memory_space<vmem>>, vector<1x24x32xbf16>
    %1 = vector.shape_cast %0 : vector<1x24x32xbf16> to vector<24x32xbf16>
    %c0_2 = arith.constant 0 : index
    %c0_3 = arith.constant 0 : index
    %c0_4 = arith.constant 0 : index
    %2 = vector.load %arg2[%c0_2, %c0_3, %c0_4] : memref<1x32x128xbf16, #tpu.memory_space<vmem>>, vector<1x32x128xbf16>
    %3 = vector.shape_cast %2 : vector<1x32x128xbf16> to vector<32x128xbf16>
    %cst = arith.constant dense<0.000000e+00> : vector<24x128xf32>
    %4 = tpu.matmul %1, %3, %cst {dimension_numbers = #tpu.dot_dimension_numbers<[1], [0], [0], [1], [0, 0, 1, 1], [], []>} : vector<24x32xbf16>, vector<32x128xbf16>, vector<24x128xf32> -> vector<24x128xf32>
    %c0_5 = arith.constant 0 : index
    %c0_6 = arith.constant 0 : index
    %c0_7 = arith.constant 0 : index
    %5 = vector.load %arg4[%c0_5, %c0_6, %c0_7] : memref<1x1x128xf32, #tpu.memory_space<vmem>>, vector<1x1x128xf32>
    %6 = vector.shape_cast %5 : vector<1x1x128xf32> to vector<1x128xf32>
    %7 = vector.broadcast %6 : vector<1x128xf32> to vector<24x128xf32>
    %8 = arith.addf %4, %7 : vector<24x128xf32>
    %9 = vector.extract_strided_slice %8 {offsets = [0, 0], sizes = [24, 16], strides = [1, 1]} : vector<24x128xf32> to vector<24x16xf32>
    %10 = vector.extract_strided_slice %8 {offsets = [0, 16], sizes = [24, 16], strides = [1, 1]} : vector<24x128xf32> to vector<24x16xf32>
    %11 = vector.extract_strided_slice %8 {offsets = [0, 32], sizes = [24, 16], strides = [1, 1]} : vector<24x128xf32> to vector<24x16xf32>
    %12 = vector.extract_strided_slice %8 {offsets = [0, 48], sizes = [24, 16], strides = [1, 1]} : vector<24x128xf32> to vector<24x16xf32>
    %13 = vector.extract_strided_slice %8 {offsets = [0, 64], sizes = [24, 16], strides = [1, 1]} : vector<24x128xf32> to vector<24x16xf32>
    %14 = vector.extract_strided_slice %8 {offsets = [0, 80], sizes = [24, 16], strides = [1, 1]} : vector<24x128xf32> to vector<24x16xf32>
    %15 = vector.extract_strided_slice %8 {offsets = [0, 96], sizes = [24, 16], strides = [1, 1]} : vector<24x128xf32> to vector<24x16xf32>
    %16 = vector.extract_strided_slice %8 {offsets = [0, 112], sizes = [24, 16], strides = [1, 1]} : vector<24x128xf32> to vector<24x16xf32>
    %cst_8 = arith.constant 0.000000e+00 : f32
    %17 = vector.broadcast %cst_8 : f32 to vector<8x16xf32>
    %18 = arith.truncf %17 : vector<8x16xf32> to vector<8x16xbf16>
    %19 = vector.extract_strided_slice %9 {offsets = [0, 0], sizes = [8, 16], strides = [1, 1]} : vector<24x16xf32> to vector<8x16xf32>
    %c0_9 = arith.constant 0 : index
    %c0_10 = arith.constant 0 : index
    %c0_11 = arith.constant 0 : index
    %c0_12 = arith.constant 0 : index
    %20 = vector.load %arg3[%c0_9, %c0_10, %c0_11, %c0_12] : memref<1x8x16x16xbf16, #tpu.memory_space<vmem>>, vector<1x1x16x16xbf16>
    %21 = vector.shape_cast %20 : vector<1x1x16x16xbf16> to vector<16x16xbf16>
    %cst_13 = arith.constant dense<0.000000e+00> : vector<8x16xf32>
    %22 = tpu.matmul %18, %21, %cst_13 {dimension_numbers = #tpu.dot_dimension_numbers<[1], [0], [0], [1], [0, 0, 1, 1], [], []>} : vector<8x16xbf16>, vector<16x16xbf16>, vector<8x16xf32> -> vector<8x16xf32>
    %23 = arith.addf %19, %22 : vector<8x16xf32>
    %24 = vector.extract_strided_slice %10 {offsets = [0, 0], sizes = [8, 16], strides = [1, 1]} : vector<24x16xf32> to vector<8x16xf32>
    %c0_14 = arith.constant 0 : index
    %c1 = arith.constant 1 : index
    %c0_15 = arith.constant 0 : index
    %c0_16 = arith.constant 0 : index
    %25 = vector.load %arg3[%c0_14, %c1, %c0_15, %c0_16] : memref<1x8x16x16xbf16, #tpu.memory_space<vmem>>, vector<1x1x16x16xbf16>
    %26 = vector.shape_cast %25 : vector<1x1x16x16xbf16> to vector<16x16xbf16>
    %cst_17 = arith.constant dense<0.000000e+00> : vector<8x16xf32>
    %27 = tpu.matmul %18, %26, %cst_17 {dimension_numbers = #tpu.dot_dimension_numbers<[1], [0], [0], [1], [0, 0, 1, 1], [], []>} : vector<8x16xbf16>, vector<16x16xbf16>, vector<8x16xf32> -> vector<8x16xf32>
    %28 = arith.addf %24, %27 : vector<8x16xf32>
    %29 = vector.extract_strided_slice %11 {offsets = [0, 0], sizes = [8, 16], strides = [1, 1]} : vector<24x16xf32> to vector<8x16xf32>
    %c0_18 = arith.constant 0 : index
    %c2 = arith.constant 2 : index
    %c0_19 = arith.constant 0 : index
    %c0_20 = arith.constant 0 : index
    %30 = vector.load %arg3[%c0_18, %c2, %c0_19, %c0_20] : memref<1x8x16x16xbf16, #tpu.memory_space<vmem>>, vector<1x1x16x16xbf16>
    %31 = vector.shape_cast %30 : vector<1x1x16x16xbf16> to vector<16x16xbf16>
    %cst_21 = arith.constant dense<0.000000e+00> : vector<8x16xf32>
    %32 = tpu.matmul %18, %31, %cst_21 {dimension_numbers = #tpu.dot_dimension_numbers<[1], [0], [0], [1], [0, 0, 1, 1], [], []>} : vector<8x16xbf16>, vector<16x16xbf16>, vector<8x16xf32> -> vector<8x16xf32>
    %33 = arith.addf %29, %32 : vector<8x16xf32>
    %34 = vector.extract_strided_slice %12 {offsets = [0, 0], sizes = [8, 16], strides = [1, 1]} : vector<24x16xf32> to vector<8x16xf32>
    %c0_22 = arith.constant 0 : index
    %c3 = arith.constant 3 : index
    %c0_23 = arith.constant 0 : index
    %c0_24 = arith.constant 0 : index
    %35 = vector.load %arg3[%c0_22, %c3, %c0_23, %c0_24] : memref<1x8x16x16xbf16, #tpu.memory_space<vmem>>, vector<1x1x16x16xbf16>
    %36 = vector.shape_cast %35 : vector<1x1x16x16xbf16> to vector<16x16xbf16>
    %cst_25 = arith.constant dense<0.000000e+00> : vector<8x16xf32>
    %37 = tpu.matmul %18, %36, %cst_25 {dimension_numbers = #tpu.dot_dimension_numbers<[1], [0], [0], [1], [0, 0, 1, 1], [], []>} : vector<8x16xbf16>, vector<16x16xbf16>, vector<8x16xf32> -> vector<8x16xf32>
    %38 = arith.addf %34, %37 : vector<8x16xf32>
    %39 = arith.negf %23 : vector<8x16xf32>
    %40 = math.exp %39 : vector<8x16xf32>
    %cst_26 = arith.constant 1.000000e+00 : f32
    %41 = vector.broadcast %cst_26 : f32 to vector<8x16xf32>
    %42 = arith.addf %41, %40 : vector<8x16xf32>
    %43 = arith.divf %41, %42 : vector<8x16xf32>
    %44 = arith.negf %28 : vector<8x16xf32>
    %45 = math.exp %44 : vector<8x16xf32>
    %cst_27 = arith.constant 1.000000e+00 : f32
    %46 = vector.broadcast %cst_27 : f32 to vector<8x16xf32>
    %47 = arith.addf %46, %45 : vector<8x16xf32>
    %48 = arith.divf %46, %47 : vector<8x16xf32>
    %49 = math.tanh %33 : vector<8x16xf32>
    %50 = arith.negf %38 : vector<8x16xf32>
    %51 = math.exp %50 : vector<8x16xf32>
    %cst_28 = arith.constant 1.000000e+00 : f32
    %52 = vector.broadcast %cst_28 : f32 to vector<8x16xf32>
    %53 = arith.addf %52, %51 : vector<8x16xf32>
    %54 = arith.divf %52, %53 : vector<8x16xf32>
    %55 = arith.mulf %48, %17 : vector<8x16xf32>
    %56 = arith.mulf %43, %49 : vector<8x16xf32>
    %57 = arith.addf %55, %56 : vector<8x16xf32>
    %58 = math.tanh %57 : vector<8x16xf32>
    %59 = arith.mulf %54, %58 : vector<8x16xf32>
    %60 = arith.truncf %17 : vector<8x16xf32> to vector<8x16xbf16>
    %61 = vector.extract_strided_slice %13 {offsets = [16, 0], sizes = [8, 16], strides = [1, 1]} : vector<24x16xf32> to vector<8x16xf32>
    %c0_29 = arith.constant 0 : index
    %c4 = arith.constant 4 : index
    %c0_30 = arith.constant 0 : index
    %c0_31 = arith.constant 0 : index
    %62 = vector.load %arg3[%c0_29, %c4, %c0_30, %c0_31] : memref<1x8x16x16xbf16, #tpu.memory_space<vmem>>, vector<1x1x16x16xbf16>
    %63 = vector.shape_cast %62 : vector<1x1x16x16xbf16> to vector<16x16xbf16>
    %cst_32 = arith.constant dense<0.000000e+00> : vector<8x16xf32>
    %64 = tpu.matmul %60, %63, %cst_32 {dimension_numbers = #tpu.dot_dimension_numbers<[1], [0], [0], [1], [0, 0, 1, 1], [], []>} : vector<8x16xbf16>, vector<16x16xbf16>, vector<8x16xf32> -> vector<8x16xf32>
    %65 = arith.addf %61, %64 : vector<8x16xf32>
    %66 = vector.extract_strided_slice %14 {offsets = [16, 0], sizes = [8, 16], strides = [1, 1]} : vector<24x16xf32> to vector<8x16xf32>
    %c0_33 = arith.constant 0 : index
    %c5 = arith.constant 5 : index
    %c0_34 = arith.constant 0 : index
    %c0_35 = arith.constant 0 : index
    %67 = vector.load %arg3[%c0_33, %c5, %c0_34, %c0_35] : memref<1x8x16x16xbf16, #tpu.memory_space<vmem>>, vector<1x1x16x16xbf16>
    %68 = vector.shape_cast %67 : vector<1x1x16x16xbf16> to vector<16x16xbf16>
    %cst_36 = arith.constant dense<0.000000e+00> : vector<8x16xf32>
    %69 = tpu.matmul %60, %68, %cst_36 {dimension_numbers = #tpu.dot_dimension_numbers<[1], [0], [0], [1], [0, 0, 1, 1], [], []>} : vector<8x16xbf16>, vector<16x16xbf16>, vector<8x16xf32> -> vector<8x16xf32>
    %70 = arith.addf %66, %69 : vector<8x16xf32>
    %71 = vector.extract_strided_slice %15 {offsets = [16, 0], sizes = [8, 16], strides = [1, 1]} : vector<24x16xf32> to vector<8x16xf32>
    %c0_37 = arith.constant 0 : index
    %c6 = arith.constant 6 : index
    %c0_38 = arith.constant 0 : index
    %c0_39 = arith.constant 0 : index
    %72 = vector.load %arg3[%c0_37, %c6, %c0_38, %c0_39] : memref<1x8x16x16xbf16, #tpu.memory_space<vmem>>, vector<1x1x16x16xbf16>
    %73 = vector.shape_cast %72 : vector<1x1x16x16xbf16> to vector<16x16xbf16>
    %cst_40 = arith.constant dense<0.000000e+00> : vector<8x16xf32>
    %74 = tpu.matmul %60, %73, %cst_40 {dimension_numbers = #tpu.dot_dimension_numbers<[1], [0], [0], [1], [0, 0, 1, 1], [], []>} : vector<8x16xbf16>, vector<16x16xbf16>, vector<8x16xf32> -> vector<8x16xf32>
    %75 = arith.addf %71, %74 : vector<8x16xf32>
    %76 = vector.extract_strided_slice %16 {offsets = [16, 0], sizes = [8, 16], strides = [1, 1]} : vector<24x16xf32> to vector<8x16xf32>
    %c0_41 = arith.constant 0 : index
    %c7 = arith.constant 7 : index
    %c0_42 = arith.constant 0 : index
    %c0_43 = arith.constant 0 : index
    %77 = vector.load %arg3[%c0_41, %c7, %c0_42, %c0_43] : memref<1x8x16x16xbf16, #tpu.memory_space<vmem>>, vector<1x1x16x16xbf16>
    %78 = vector.shape_cast %77 : vector<1x1x16x16xbf16> to vector<16x16xbf16>
    %cst_44 = arith.constant dense<0.000000e+00> : vector<8x16xf32>
    %79 = tpu.matmul %60, %78, %cst_44 {dimension_numbers = #tpu.dot_dimension_numbers<[1], [0], [0], [1], [0, 0, 1, 1], [], []>} : vector<8x16xbf16>, vector<16x16xbf16>, vector<8x16xf32> -> vector<8x16xf32>
    %80 = arith.addf %76, %79 : vector<8x16xf32>
    %81 = arith.negf %65 : vector<8x16xf32>
    %82 = math.exp %81 : vector<8x16xf32>
    %cst_45 = arith.constant 1.000000e+00 : f32
    %83 = vector.broadcast %cst_45 : f32 to vector<8x16xf32>
    %84 = arith.addf %83, %82 : vector<8x16xf32>
    %85 = arith.divf %83, %84 : vector<8x16xf32>
    %86 = arith.negf %70 : vector<8x16xf32>
    %87 = math.exp %86 : vector<8x16xf32>
    %cst_46 = arith.constant 1.000000e+00 : f32
    %88 = vector.broadcast %cst_46 : f32 to vector<8x16xf32>
    %89 = arith.addf %88, %87 : vector<8x16xf32>
    %90 = arith.divf %88, %89 : vector<8x16xf32>
    %91 = math.tanh %75 : vector<8x16xf32>
    %92 = arith.negf %80 : vector<8x16xf32>
    %93 = math.exp %92 : vector<8x16xf32>
    %cst_47 = arith.constant 1.000000e+00 : f32
    %94 = vector.broadcast %cst_47 : f32 to vector<8x16xf32>
    %95 = arith.addf %94, %93 : vector<8x16xf32>
    %96 = arith.divf %94, %95 : vector<8x16xf32>
    %97 = arith.mulf %90, %17 : vector<8x16xf32>
    %98 = arith.mulf %85, %91 : vector<8x16xf32>
    %99 = arith.addf %97, %98 : vector<8x16xf32>
    %100 = math.tanh %99 : vector<8x16xf32>
    %101 = arith.mulf %96, %100 : vector<8x16xf32>
    %102 = arith.addf %17, %59 : vector<8x16xf32>
    %103 = arith.addf %17, %101 : vector<8x16xf32>
    %104 = arith.truncf %59 : vector<8x16xf32> to vector<8x16xbf16>
    %105 = vector.extract_strided_slice %9 {offsets = [8, 0], sizes = [8, 16], strides = [1, 1]} : vector<24x16xf32> to vector<8x16xf32>
    %c0_48 = arith.constant 0 : index
    %c0_49 = arith.constant 0 : index
    %c0_50 = arith.constant 0 : index
    %c0_51 = arith.constant 0 : index
    %106 = vector.load %arg3[%c0_48, %c0_49, %c0_50, %c0_51] : memref<1x8x16x16xbf16, #tpu.memory_space<vmem>>, vector<1x1x16x16xbf16>
    %107 = vector.shape_cast %106 : vector<1x1x16x16xbf16> to vector<16x16xbf16>
    %cst_52 = arith.constant dense<0.000000e+00> : vector<8x16xf32>
    %108 = tpu.matmul %104, %107, %cst_52 {dimension_numbers = #tpu.dot_dimension_numbers<[1], [0], [0], [1], [0, 0, 1, 1], [], []>} : vector<8x16xbf16>, vector<16x16xbf16>, vector<8x16xf32> -> vector<8x16xf32>
    %109 = arith.addf %105, %108 : vector<8x16xf32>
    %110 = vector.extract_strided_slice %10 {offsets = [8, 0], sizes = [8, 16], strides = [1, 1]} : vector<24x16xf32> to vector<8x16xf32>
    %c0_53 = arith.constant 0 : index
    %c1_54 = arith.constant 1 : index
    %c0_55 = arith.constant 0 : index
    %c0_56 = arith.constant 0 : index
    %111 = vector.load %arg3[%c0_53, %c1_54, %c0_55, %c0_56] : memref<1x8x16x16xbf16, #tpu.memory_space<vmem>>, vector<1x1x16x16xbf16>
    %112 = vector.shape_cast %111 : vector<1x1x16x16xbf16> to vector<16x16xbf16>
    %cst_57 = arith.constant dense<0.000000e+00> : vector<8x16xf32>
    %113 = tpu.matmul %104, %112, %cst_57 {dimension_numbers = #tpu.dot_dimension_numbers<[1], [0], [0], [1], [0, 0, 1, 1], [], []>} : vector<8x16xbf16>, vector<16x16xbf16>, vector<8x16xf32> -> vector<8x16xf32>
    %114 = arith.addf %110, %113 : vector<8x16xf32>
    %115 = vector.extract_strided_slice %11 {offsets = [8, 0], sizes = [8, 16], strides = [1, 1]} : vector<24x16xf32> to vector<8x16xf32>
    %c0_58 = arith.constant 0 : index
    %c2_59 = arith.constant 2 : index
    %c0_60 = arith.constant 0 : index
    %c0_61 = arith.constant 0 : index
    %116 = vector.load %arg3[%c0_58, %c2_59, %c0_60, %c0_61] : memref<1x8x16x16xbf16, #tpu.memory_space<vmem>>, vector<1x1x16x16xbf16>
    %117 = vector.shape_cast %116 : vector<1x1x16x16xbf16> to vector<16x16xbf16>
    %cst_62 = arith.constant dense<0.000000e+00> : vector<8x16xf32>
    %118 = tpu.matmul %104, %117, %cst_62 {dimension_numbers = #tpu.dot_dimension_numbers<[1], [0], [0], [1], [0, 0, 1, 1], [], []>} : vector<8x16xbf16>, vector<16x16xbf16>, vector<8x16xf32> -> vector<8x16xf32>
    %119 = arith.addf %115, %118 : vector<8x16xf32>
    %120 = vector.extract_strided_slice %12 {offsets = [8, 0], sizes = [8, 16], strides = [1, 1]} : vector<24x16xf32> to vector<8x16xf32>
    %c0_63 = arith.constant 0 : index
    %c3_64 = arith.constant 3 : index
    %c0_65 = arith.constant 0 : index
    %c0_66 = arith.constant 0 : index
    %121 = vector.load %arg3[%c0_63, %c3_64, %c0_65, %c0_66] : memref<1x8x16x16xbf16, #tpu.memory_space<vmem>>, vector<1x1x16x16xbf16>
    %122 = vector.shape_cast %121 : vector<1x1x16x16xbf16> to vector<16x16xbf16>
    %cst_67 = arith.constant dense<0.000000e+00> : vector<8x16xf32>
    %123 = tpu.matmul %104, %122, %cst_67 {dimension_numbers = #tpu.dot_dimension_numbers<[1], [0], [0], [1], [0, 0, 1, 1], [], []>} : vector<8x16xbf16>, vector<16x16xbf16>, vector<8x16xf32> -> vector<8x16xf32>
    %124 = arith.addf %120, %123 : vector<8x16xf32>
    %125 = arith.negf %109 : vector<8x16xf32>
    %126 = math.exp %125 : vector<8x16xf32>
    %cst_68 = arith.constant 1.000000e+00 : f32
    %127 = vector.broadcast %cst_68 : f32 to vector<8x16xf32>
    %128 = arith.addf %127, %126 : vector<8x16xf32>
    %129 = arith.divf %127, %128 : vector<8x16xf32>
    %130 = arith.negf %114 : vector<8x16xf32>
    %131 = math.exp %130 : vector<8x16xf32>
    %cst_69 = arith.constant 1.000000e+00 : f32
    %132 = vector.broadcast %cst_69 : f32 to vector<8x16xf32>
    %133 = arith.addf %132, %131 : vector<8x16xf32>
    %134 = arith.divf %132, %133 : vector<8x16xf32>
    %135 = math.tanh %119 : vector<8x16xf32>
    %136 = arith.negf %124 : vector<8x16xf32>
    %137 = math.exp %136 : vector<8x16xf32>
    %cst_70 = arith.constant 1.000000e+00 : f32
    %138 = vector.broadcast %cst_70 : f32 to vector<8x16xf32>
    %139 = arith.addf %138, %137 : vector<8x16xf32>
    %140 = arith.divf %138, %139 : vector<8x16xf32>
    %141 = arith.mulf %134, %57 : vector<8x16xf32>
    %142 = arith.mulf %129, %135 : vector<8x16xf32>
    %143 = arith.addf %141, %142 : vector<8x16xf32>
    %144 = math.tanh %143 : vector<8x16xf32>
    %145 = arith.mulf %140, %144 : vector<8x16xf32>
    %146 = arith.truncf %101 : vector<8x16xf32> to vector<8x16xbf16>
    %147 = vector.extract_strided_slice %13 {offsets = [8, 0], sizes = [8, 16], strides = [1, 1]} : vector<24x16xf32> to vector<8x16xf32>
    %c0_71 = arith.constant 0 : index
    %c4_72 = arith.constant 4 : index
    %c0_73 = arith.constant 0 : index
    %c0_74 = arith.constant 0 : index
    %148 = vector.load %arg3[%c0_71, %c4_72, %c0_73, %c0_74] : memref<1x8x16x16xbf16, #tpu.memory_space<vmem>>, vector<1x1x16x16xbf16>
    %149 = vector.shape_cast %148 : vector<1x1x16x16xbf16> to vector<16x16xbf16>
    %cst_75 = arith.constant dense<0.000000e+00> : vector<8x16xf32>
    %150 = tpu.matmul %146, %149, %cst_75 {dimension_numbers = #tpu.dot_dimension_numbers<[1], [0], [0], [1], [0, 0, 1, 1], [], []>} : vector<8x16xbf16>, vector<16x16xbf16>, vector<8x16xf32> -> vector<8x16xf32>
    %151 = arith.addf %147, %150 : vector<8x16xf32>
    %152 = vector.extract_strided_slice %14 {offsets = [8, 0], sizes = [8, 16], strides = [1, 1]} : vector<24x16xf32> to vector<8x16xf32>
    %c0_76 = arith.constant 0 : index
    %c5_77 = arith.constant 5 : index
    %c0_78 = arith.constant 0 : index
    %c0_79 = arith.constant 0 : index
    %153 = vector.load %arg3[%c0_76, %c5_77, %c0_78, %c0_79] : memref<1x8x16x16xbf16, #tpu.memory_space<vmem>>, vector<1x1x16x16xbf16>
    %154 = vector.shape_cast %153 : vector<1x1x16x16xbf16> to vector<16x16xbf16>
    %cst_80 = arith.constant dense<0.000000e+00> : vector<8x16xf32>
    %155 = tpu.matmul %146, %154, %cst_80 {dimension_numbers = #tpu.dot_dimension_numbers<[1], [0], [0], [1], [0, 0, 1, 1], [], []>} : vector<8x16xbf16>, vector<16x16xbf16>, vector<8x16xf32> -> vector<8x16xf32>
    %156 = arith.addf %152, %155 : vector<8x16xf32>
    %157 = vector.extract_strided_slice %15 {offsets = [8, 0], sizes = [8, 16], strides = [1, 1]} : vector<24x16xf32> to vector<8x16xf32>
    %c0_81 = arith.constant 0 : index
    %c6_82 = arith.constant 6 : index
    %c0_83 = arith.constant 0 : index
    %c0_84 = arith.constant 0 : index
    %158 = vector.load %arg3[%c0_81, %c6_82, %c0_83, %c0_84] : memref<1x8x16x16xbf16, #tpu.memory_space<vmem>>, vector<1x1x16x16xbf16>
    %159 = vector.shape_cast %158 : vector<1x1x16x16xbf16> to vector<16x16xbf16>
    %cst_85 = arith.constant dense<0.000000e+00> : vector<8x16xf32>
    %160 = tpu.matmul %146, %159, %cst_85 {dimension_numbers = #tpu.dot_dimension_numbers<[1], [0], [0], [1], [0, 0, 1, 1], [], []>} : vector<8x16xbf16>, vector<16x16xbf16>, vector<8x16xf32> -> vector<8x16xf32>
    %161 = arith.addf %157, %160 : vector<8x16xf32>
    %162 = vector.extract_strided_slice %16 {offsets = [8, 0], sizes = [8, 16], strides = [1, 1]} : vector<24x16xf32> to vector<8x16xf32>
    %c0_86 = arith.constant 0 : index
    %c7_87 = arith.constant 7 : index
    %c0_88 = arith.constant 0 : index
    %c0_89 = arith.constant 0 : index
    %163 = vector.load %arg3[%c0_86, %c7_87, %c0_88, %c0_89] : memref<1x8x16x16xbf16, #tpu.memory_space<vmem>>, vector<1x1x16x16xbf16>
    %164 = vector.shape_cast %163 : vector<1x1x16x16xbf16> to vector<16x16xbf16>
    %cst_90 = arith.constant dense<0.000000e+00> : vector<8x16xf32>
    %165 = tpu.matmul %146, %164, %cst_90 {dimension_numbers = #tpu.dot_dimension_numbers<[1], [0], [0], [1], [0, 0, 1, 1], [], []>} : vector<8x16xbf16>, vector<16x16xbf16>, vector<8x16xf32> -> vector<8x16xf32>
    %166 = arith.addf %162, %165 : vector<8x16xf32>
    %167 = arith.negf %151 : vector<8x16xf32>
    %168 = math.exp %167 : vector<8x16xf32>
    %cst_91 = arith.constant 1.000000e+00 : f32
    %169 = vector.broadcast %cst_91 : f32 to vector<8x16xf32>
    %170 = arith.addf %169, %168 : vector<8x16xf32>
    %171 = arith.divf %169, %170 : vector<8x16xf32>
    %172 = arith.negf %156 : vector<8x16xf32>
    %173 = math.exp %172 : vector<8x16xf32>
    %cst_92 = arith.constant 1.000000e+00 : f32
    %174 = vector.broadcast %cst_92 : f32 to vector<8x16xf32>
    %175 = arith.addf %174, %173 : vector<8x16xf32>
    %176 = arith.divf %174, %175 : vector<8x16xf32>
    %177 = math.tanh %161 : vector<8x16xf32>
    %178 = arith.negf %166 : vector<8x16xf32>
    %179 = math.exp %178 : vector<8x16xf32>
    %cst_93 = arith.constant 1.000000e+00 : f32
    %180 = vector.broadcast %cst_93 : f32 to vector<8x16xf32>
    %181 = arith.addf %180, %179 : vector<8x16xf32>
    %182 = arith.divf %180, %181 : vector<8x16xf32>
    %183 = arith.mulf %176, %99 : vector<8x16xf32>
    %184 = arith.mulf %171, %177 : vector<8x16xf32>
    %185 = arith.addf %183, %184 : vector<8x16xf32>
    %186 = math.tanh %185 : vector<8x16xf32>
    %187 = arith.mulf %182, %186 : vector<8x16xf32>
    %188 = arith.addf %102, %145 : vector<8x16xf32>
    %189 = arith.addf %103, %187 : vector<8x16xf32>
    %190 = arith.truncf %145 : vector<8x16xf32> to vector<8x16xbf16>
    %191 = vector.extract_strided_slice %9 {offsets = [16, 0], sizes = [8, 16], strides = [1, 1]} : vector<24x16xf32> to vector<8x16xf32>
    %c0_94 = arith.constant 0 : index
    %c0_95 = arith.constant 0 : index
    %c0_96 = arith.constant 0 : index
    %c0_97 = arith.constant 0 : index
    %192 = vector.load %arg3[%c0_94, %c0_95, %c0_96, %c0_97] : memref<1x8x16x16xbf16, #tpu.memory_space<vmem>>, vector<1x1x16x16xbf16>
    %193 = vector.shape_cast %192 : vector<1x1x16x16xbf16> to vector<16x16xbf16>
    %cst_98 = arith.constant dense<0.000000e+00> : vector<8x16xf32>
    %194 = tpu.matmul %190, %193, %cst_98 {dimension_numbers = #tpu.dot_dimension_numbers<[1], [0], [0], [1], [0, 0, 1, 1], [], []>} : vector<8x16xbf16>, vector<16x16xbf16>, vector<8x16xf32> -> vector<8x16xf32>
    %195 = arith.addf %191, %194 : vector<8x16xf32>
    %196 = vector.extract_strided_slice %10 {offsets = [16, 0], sizes = [8, 16], strides = [1, 1]} : vector<24x16xf32> to vector<8x16xf32>
    %c0_99 = arith.constant 0 : index
    %c1_100 = arith.constant 1 : index
    %c0_101 = arith.constant 0 : index
    %c0_102 = arith.constant 0 : index
    %197 = vector.load %arg3[%c0_99, %c1_100, %c0_101, %c0_102] : memref<1x8x16x16xbf16, #tpu.memory_space<vmem>>, vector<1x1x16x16xbf16>
    %198 = vector.shape_cast %197 : vector<1x1x16x16xbf16> to vector<16x16xbf16>
    %cst_103 = arith.constant dense<0.000000e+00> : vector<8x16xf32>
    %199 = tpu.matmul %190, %198, %cst_103 {dimension_numbers = #tpu.dot_dimension_numbers<[1], [0], [0], [1], [0, 0, 1, 1], [], []>} : vector<8x16xbf16>, vector<16x16xbf16>, vector<8x16xf32> -> vector<8x16xf32>
    %200 = arith.addf %196, %199 : vector<8x16xf32>
    %201 = vector.extract_strided_slice %11 {offsets = [16, 0], sizes = [8, 16], strides = [1, 1]} : vector<24x16xf32> to vector<8x16xf32>
    %c0_104 = arith.constant 0 : index
    %c2_105 = arith.constant 2 : index
    %c0_106 = arith.constant 0 : index
    %c0_107 = arith.constant 0 : index
    %202 = vector.load %arg3[%c0_104, %c2_105, %c0_106, %c0_107] : memref<1x8x16x16xbf16, #tpu.memory_space<vmem>>, vector<1x1x16x16xbf16>
    %203 = vector.shape_cast %202 : vector<1x1x16x16xbf16> to vector<16x16xbf16>
    %cst_108 = arith.constant dense<0.000000e+00> : vector<8x16xf32>
    %204 = tpu.matmul %190, %203, %cst_108 {dimension_numbers = #tpu.dot_dimension_numbers<[1], [0], [0], [1], [0, 0, 1, 1], [], []>} : vector<8x16xbf16>, vector<16x16xbf16>, vector<8x16xf32> -> vector<8x16xf32>
    %205 = arith.addf %201, %204 : vector<8x16xf32>
    %206 = vector.extract_strided_slice %12 {offsets = [16, 0], sizes = [8, 16], strides = [1, 1]} : vector<24x16xf32> to vector<8x16xf32>
    %c0_109 = arith.constant 0 : index
    %c3_110 = arith.constant 3 : index
    %c0_111 = arith.constant 0 : index
    %c0_112 = arith.constant 0 : index
    %207 = vector.load %arg3[%c0_109, %c3_110, %c0_111, %c0_112] : memref<1x8x16x16xbf16, #tpu.memory_space<vmem>>, vector<1x1x16x16xbf16>
    %208 = vector.shape_cast %207 : vector<1x1x16x16xbf16> to vector<16x16xbf16>
    %cst_113 = arith.constant dense<0.000000e+00> : vector<8x16xf32>
    %209 = tpu.matmul %190, %208, %cst_113 {dimension_numbers = #tpu.dot_dimension_numbers<[1], [0], [0], [1], [0, 0, 1, 1], [], []>} : vector<8x16xbf16>, vector<16x16xbf16>, vector<8x16xf32> -> vector<8x16xf32>
    %210 = arith.addf %206, %209 : vector<8x16xf32>
    %211 = arith.negf %195 : vector<8x16xf32>
    %212 = math.exp %211 : vector<8x16xf32>
    %cst_114 = arith.constant 1.000000e+00 : f32
    %213 = vector.broadcast %cst_114 : f32 to vector<8x16xf32>
    %214 = arith.addf %213, %212 : vector<8x16xf32>
    %215 = arith.divf %213, %214 : vector<8x16xf32>
    %216 = arith.negf %200 : vector<8x16xf32>
    %217 = math.exp %216 : vector<8x16xf32>
    %cst_115 = arith.constant 1.000000e+00 : f32
    %218 = vector.broadcast %cst_115 : f32 to vector<8x16xf32>
    %219 = arith.addf %218, %217 : vector<8x16xf32>
    %220 = arith.divf %218, %219 : vector<8x16xf32>
    %221 = math.tanh %205 : vector<8x16xf32>
    %222 = arith.negf %210 : vector<8x16xf32>
    %223 = math.exp %222 : vector<8x16xf32>
    %cst_116 = arith.constant 1.000000e+00 : f32
    %224 = vector.broadcast %cst_116 : f32 to vector<8x16xf32>
    %225 = arith.addf %224, %223 : vector<8x16xf32>
    %226 = arith.divf %224, %225 : vector<8x16xf32>
    %227 = arith.mulf %220, %143 : vector<8x16xf32>
    %228 = arith.mulf %215, %221 : vector<8x16xf32>
    %229 = arith.addf %227, %228 : vector<8x16xf32>
    %230 = math.tanh %229 : vector<8x16xf32>
    %231 = arith.mulf %226, %230 : vector<8x16xf32>
    %232 = arith.truncf %187 : vector<8x16xf32> to vector<8x16xbf16>
    %233 = vector.extract_strided_slice %13 {offsets = [0, 0], sizes = [8, 16], strides = [1, 1]} : vector<24x16xf32> to vector<8x16xf32>
    %c0_117 = arith.constant 0 : index
    %c4_118 = arith.constant 4 : index
    %c0_119 = arith.constant 0 : index
    %c0_120 = arith.constant 0 : index
    %234 = vector.load %arg3[%c0_117, %c4_118, %c0_119, %c0_120] : memref<1x8x16x16xbf16, #tpu.memory_space<vmem>>, vector<1x1x16x16xbf16>
    %235 = vector.shape_cast %234 : vector<1x1x16x16xbf16> to vector<16x16xbf16>
    %cst_121 = arith.constant dense<0.000000e+00> : vector<8x16xf32>
    %236 = tpu.matmul %232, %235, %cst_121 {dimension_numbers = #tpu.dot_dimension_numbers<[1], [0], [0], [1], [0, 0, 1, 1], [], []>} : vector<8x16xbf16>, vector<16x16xbf16>, vector<8x16xf32> -> vector<8x16xf32>
    %237 = arith.addf %233, %236 : vector<8x16xf32>
    %238 = vector.extract_strided_slice %14 {offsets = [0, 0], sizes = [8, 16], strides = [1, 1]} : vector<24x16xf32> to vector<8x16xf32>
    %c0_122 = arith.constant 0 : index
    %c5_123 = arith.constant 5 : index
    %c0_124 = arith.constant 0 : index
    %c0_125 = arith.constant 0 : index
    %239 = vector.load %arg3[%c0_122, %c5_123, %c0_124, %c0_125] : memref<1x8x16x16xbf16, #tpu.memory_space<vmem>>, vector<1x1x16x16xbf16>
    %240 = vector.shape_cast %239 : vector<1x1x16x16xbf16> to vector<16x16xbf16>
    %cst_126 = arith.constant dense<0.000000e+00> : vector<8x16xf32>
    %241 = tpu.matmul %232, %240, %cst_126 {dimension_numbers = #tpu.dot_dimension_numbers<[1], [0], [0], [1], [0, 0, 1, 1], [], []>} : vector<8x16xbf16>, vector<16x16xbf16>, vector<8x16xf32> -> vector<8x16xf32>
    %242 = arith.addf %238, %241 : vector<8x16xf32>
    %243 = vector.extract_strided_slice %15 {offsets = [0, 0], sizes = [8, 16], strides = [1, 1]} : vector<24x16xf32> to vector<8x16xf32>
    %c0_127 = arith.constant 0 : index
    %c6_128 = arith.constant 6 : index
    %c0_129 = arith.constant 0 : index
    %c0_130 = arith.constant 0 : index
    %244 = vector.load %arg3[%c0_127, %c6_128, %c0_129, %c0_130] : memref<1x8x16x16xbf16, #tpu.memory_space<vmem>>, vector<1x1x16x16xbf16>
    %245 = vector.shape_cast %244 : vector<1x1x16x16xbf16> to vector<16x16xbf16>
    %cst_131 = arith.constant dense<0.000000e+00> : vector<8x16xf32>
    %246 = tpu.matmul %232, %245, %cst_131 {dimension_numbers = #tpu.dot_dimension_numbers<[1], [0], [0], [1], [0, 0, 1, 1], [], []>} : vector<8x16xbf16>, vector<16x16xbf16>, vector<8x16xf32> -> vector<8x16xf32>
    %247 = arith.addf %243, %246 : vector<8x16xf32>
    %248 = vector.extract_strided_slice %16 {offsets = [0, 0], sizes = [8, 16], strides = [1, 1]} : vector<24x16xf32> to vector<8x16xf32>
    %c0_132 = arith.constant 0 : index
    %c7_133 = arith.constant 7 : index
    %c0_134 = arith.constant 0 : index
    %c0_135 = arith.constant 0 : index
    %249 = vector.load %arg3[%c0_132, %c7_133, %c0_134, %c0_135] : memref<1x8x16x16xbf16, #tpu.memory_space<vmem>>, vector<1x1x16x16xbf16>
    %250 = vector.shape_cast %249 : vector<1x1x16x16xbf16> to vector<16x16xbf16>
    %cst_136 = arith.constant dense<0.000000e+00> : vector<8x16xf32>
    %251 = tpu.matmul %232, %250, %cst_136 {dimension_numbers = #tpu.dot_dimension_numbers<[1], [0], [0], [1], [0, 0, 1, 1], [], []>} : vector<8x16xbf16>, vector<16x16xbf16>, vector<8x16xf32> -> vector<8x16xf32>
    %252 = arith.addf %248, %251 : vector<8x16xf32>
    %253 = arith.negf %237 : vector<8x16xf32>
    %254 = math.exp %253 : vector<8x16xf32>
    %cst_137 = arith.constant 1.000000e+00 : f32
    %255 = vector.broadcast %cst_137 : f32 to vector<8x16xf32>
    %256 = arith.addf %255, %254 : vector<8x16xf32>
    %257 = arith.divf %255, %256 : vector<8x16xf32>
    %258 = arith.negf %242 : vector<8x16xf32>
    %259 = math.exp %258 : vector<8x16xf32>
    %cst_138 = arith.constant 1.000000e+00 : f32
    %260 = vector.broadcast %cst_138 : f32 to vector<8x16xf32>
    %261 = arith.addf %260, %259 : vector<8x16xf32>
    %262 = arith.divf %260, %261 : vector<8x16xf32>
    %263 = math.tanh %247 : vector<8x16xf32>
    %264 = arith.negf %252 : vector<8x16xf32>
    %265 = math.exp %264 : vector<8x16xf32>
    %cst_139 = arith.constant 1.000000e+00 : f32
    %266 = vector.broadcast %cst_139 : f32 to vector<8x16xf32>
    %267 = arith.addf %266, %265 : vector<8x16xf32>
    %268 = arith.divf %266, %267 : vector<8x16xf32>
    %269 = arith.mulf %262, %185 : vector<8x16xf32>
    %270 = arith.mulf %257, %263 : vector<8x16xf32>
    %271 = arith.addf %269, %270 : vector<8x16xf32>
    %272 = math.tanh %271 : vector<8x16xf32>
    %273 = arith.mulf %268, %272 : vector<8x16xf32>
    %274 = arith.addf %188, %231 : vector<8x16xf32>
    %275 = arith.addf %189, %273 : vector<8x16xf32>
    %cst_140 = arith.constant 0.333333343 : f32
    %276 = vector.broadcast %cst_140 : f32 to vector<8x16xf32>
    %277 = arith.mulf %274, %276 : vector<8x16xf32>
    %cst_141 = arith.constant 0.333333343 : f32
    %278 = vector.broadcast %cst_141 : f32 to vector<8x16xf32>
    %279 = arith.mulf %275, %278 : vector<8x16xf32>
    %280 = tpu.concatenate %277, %279 in 1 : vector<8x16xf32>, vector<8x16xf32> -> vector<8x32xf32>
    %c0_142 = arith.constant 0 : index
    %c0_143 = arith.constant 0 : index
    %c0_144 = arith.constant 0 : index
    %281 = vector.load %arg5[%c0_142, %c0_143, %c0_144] : memref<1x8x32xf32, #tpu.memory_space<vmem>>, vector<1x8x32xf32>
    %282 = vector.shape_cast %281 : vector<1x8x32xf32> to vector<8x32xf32>
    %283 = vector.shape_cast %280 : vector<8x32xf32> to vector<1x8x32xf32>
    tpu.vector_store %arg5[%c0_142, %c0_143, %c0_144], %283 {strides = array<i32>} : memref<1x8x32xf32, #tpu.memory_space<vmem>>, vector<1x8x32xf32>,
    return
  }
  func.func @transform_0(%arg0: i32) -> (i32, i32, i32) {
    %c0_i32 = arith.constant 0 : i32
    %c0_i32_0 = arith.constant 0 : i32
    %c0_i32_1 = arith.constant 0 : i32
    return %arg0, %c0_i32, %c0_i32_0 : i32, i32, i32
  }
  func.func @transform_1(%arg0: i32) -> (i32, i32, i32) {
    %c0_i32 = arith.constant 0 : i32
    %c0_i32_0 = arith.constant 0 : i32
    %c0_i32_1 = arith.constant 0 : i32
    return %arg0, %c0_i32, %c0_i32_0 : i32, i32, i32
  }
  func.func @transform_2(%arg0: i32) -> (i32, i32, i32, i32) {
    %c0_i32 = arith.constant 0 : i32
    %c0_i32_0 = arith.constant 0 : i32
    %c0_i32_1 = arith.constant 0 : i32
    %c0_i32_2 = arith.constant 0 : i32
    return %arg0, %c0_i32, %c0_i32_0, %c0_i32_1 : i32, i32, i32, i32
  }
  func.func @transform_3(%arg0: i32) -> (i32, i32, i32) {
    %c0_i32 = arith.constant 0 : i32
    %c0_i32_0 = arith.constant 0 : i32
    %c0_i32_1 = arith.constant 0 : i32
    return %arg0, %c0_i32, %c0_i32_0 : i32, i32, i32
  }
  func.func @transform_4(%arg0: i32) -> (i32, i32, i32) {
    %c0_i32 = arith.constant 0 : i32
    %c0_i32_0 = arith.constant 0 : i32
    %c0_i32_1 = arith.constant 0 : i32
    return %arg0, %c0_i32, %c0_i32_0 : i32, i32, i32
  }
}

</mosaic_0001>

<llo_original>
// kernel: tpu_custom_call.1
$region0: #{tpu_custom_call.1}
  #allocation0 [shape = 'u32[]', space=smem, size = 0x4, offset = 0x4, fixed_abs, tag = 'smem constant byte address 0x4 - core index']
  #allocation1 [shape = 'u32[144,128]{1,0:T(1,128)}', space=vmem, size = 0x12000, scoped, tag = 'internal scratch']
  %s0 = inlined_call_operand.hbm [shape: bf16[3,24,32], index: 0, kind: input, shape index: {}]
  %s1 = inlined_call_operand.hbm [shape: bf16[3,32,128], index: 1, kind: input, shape index: {}]
  %s2 = inlined_call_operand.hbm [shape: bf16[3,8,16,16], index: 2, kind: input, shape index: {}]
  %s3 = inlined_call_operand.vmem [shape: f32[3,1,128], index: 3, kind: input, shape index: {}]
  %s4 = inlined_call_operand.hbm [shape: f32[3,8,32], index: 4, kind: output, shape index: {}]
  %s5 = sld [smem:[#allocation0]]
  $region61: #{tpu_custom_call.1} parent=0
    _
  %s7 = ssub.s32 1, %s5
  %s8 = scalar_select 0, %s7, %s5
  $region1: #{tpu_custom_call.1} parent=0
    #allocation2 [shape = 'u8[12288]{0}', space=vmem, size = 0x3000, scoped, tag = 'input window, operand 0']
    #allocation3 [shape = 's32[2]{0}', space=sflag, size = 0x8, scoped, tag = 'scoped memory for tpu_custom_call.1']
    #allocation4 [shape = 's32[2]{0}', space=sflag, size = 0x8, scoped, tag = 'scoped memory for tpu_custom_call.1']
    #allocation5 [shape = 'u8[16384]{0}', space=vmem, size = 0x4000, scoped, tag = 'input window, operand 1']
    #allocation6 [shape = 's32[2]{0}', space=sflag, size = 0x8, scoped, tag = 'scoped memory for tpu_custom_call.1']
    #allocation7 [shape = 'u8[65536]{0}', space=vmem, size = 0x10000, scoped, tag = 'input window, operand 2']
    #allocation8 [shape = 'u8[8192]{0}', space=vmem, size = 0x2000, scoped, tag = 'output window, operand 0']
    %9 = vsyncpa [#allocation3], 0
    %s10 = scalar_lea.sflag [#allocation3], 1
    %11 = vsyncpa %s10, 0
    %12 = vsyncpa [#allocation6], 0
    %s13 = scalar_lea.sflag [#allocation6], 1
    %14 = vsyncpa %s13, 0
    %15 = vsyncpa [#allocation4], 0
    %s16 = scalar_lea.sflag [#allocation4], 1
    %17 = vsyncpa %s16, 0
    loop: start=0, step=1, limit=5
    $region2: #{tpu_custom_call.1} parent=1 // loop_pre_header
      _
    $region3: #{tpu_custom_call.1} parent=1 // loop_header
      %s19 = sphi 0, %s23
      %p20 = scmp.ge.s32.totalorder %s19, 5
      %s29 = sphi 0, %s31
      %s32 = sphi 0, %s29
      %s33 = sphi 0, %s32
      %s49 = sphi 0, %s33
      %s55 = sphi 0, %s57
      %s58 = sphi 0, %s55
      %s59 = sphi 0, %s58
      %s75 = sphi 0, %s59
      %s81 = sphi 0, %s83
      %s84 = sphi 0, %s81
      %s85 = sphi 0, %s84
      %s101 = sphi 0, %s85
      %s107 = sphi 0, %s109
      %s110 = sphi 0, %s107
      %s111 = sphi 0, %s110
      %s127 = sphi 0, %s111
      %s133 = sphi 0, %s135
      %s136 = sphi 0, %s133
      %s137 = sphi 0, %s136
      %s153 = sphi 0, %s137
    $region4: #{tpu_custom_call.1} parent=1 // loop_header_branch
      %22 = sbr.rel (%p20) target = $region8
    $region5: #{tpu_custom_call.1} parent=1 // loop_body
      %s24 = ssub.s32 %s19, 1
      %s25 = ssub.s32 %s19, 2
      %s26 = sadd.s32 %s19, 1
      %s27 = ssub.s32 %s19, %s26
      %p28 = scmp.eq.s32.totalorder %s27, 0
      %s30 = sadd.s32 %s29, 1
      %s31 = scalar_select %p28, %s29, %s30
      %p34 = pneg %p28
      %p35 = scmp.eq.s32.totalorder %s19, 2
      %p36 = por %p34, %p35
      %p37 = scmp.ne.s32.totalorder %s29, %s32
      %p38 = scmp.eq.s32.totalorder %s19, 0
      %p39 = por %p37, %p38
      %p40 = scmp.ne.s32.totalorder %s29, %s32
      %p41 = scmp.eq.s32.totalorder %s24, 2
      %p42 = por %p40, %p41
      %p43 = scmp.ne.s32.totalorder %s32, %s33
      %p44 = scmp.eq.s32.totalorder %s24, 0
      %p45 = por %p43, %p44
      %p46 = scmp.ne.s32.totalorder %s32, %s33
      %p47 = scmp.eq.s32.totalorder %s25, 2
      %p48 = por %p46, %p47
      %p50 = scmp.ne.s32.totalorder %s33, %s49
      %p51 = scmp.eq.s32.totalorder %s25, 0
      %p52 = por %p50, %p51
      %s53 = ssub.s32 %s19, %s26
      %p54 = scmp.eq.s32.totalorder %s53, 0
      %s56 = sadd.s32 %s55, 1
      %s57 = scalar_select %p54, %s55, %s56
      %p60 = pneg %p54
      %p61 = scmp.eq.s32.totalorder %s19, 2
      %p62 = por %p60, %p61
      %p63 = scmp.ne.s32.totalorder %s55, %s58
      %p64 = scmp.eq.s32.totalorder %s19, 0
      %p65 = por %p63, %p64
      %p66 = scmp.ne.s32.totalorder %s55, %s58
      %p67 = scmp.eq.s32.totalorder %s24, 2
      %p68 = por %p66, %p67
      %p69 = scmp.ne.s32.totalorder %s58, %s59
      %p70 = scmp.eq.s32.totalorder %s24, 0
      %p71 = por %p69, %p70
      %p72 = scmp.ne.s32.totalorder %s58, %s59
      %p73 = scmp.eq.s32.totalorder %s25, 2
      %p74 = por %p72, %p73
      %p76 = scmp.ne.s32.totalorder %s59, %s75
      %p77 = scmp.eq.s32.totalorder %s25, 0
      %p78 = por %p76, %p77
      %s79 = ssub.s32 %s19, %s26
      %p80 = scmp.eq.s32.totalorder %s79, 0
      %s82 = sadd.s32 %s81, 1
      %s83 = scalar_select %p80, %s81, %s82
      %p86 = pneg %p80
      %p87 = scmp.eq.s32.totalorder %s19, 2
      %p88 = por %p86, %p87
      %p89 = scmp.ne.s32.totalorder %s81, %s84
      %p90 = scmp.eq.s32.totalorder %s19, 0
      %p91 = por %p89, %p90
      %p92 = scmp.ne.s32.totalorder %s81, %s84
      %p93 = scmp.eq.s32.totalorder %s24, 2
      %p94 = por %p92, %p93
      %p95 = scmp.ne.s32.totalorder %s84, %s85
      %p96 = scmp.eq.s32.totalorder %s24, 0
      %p97 = por %p95, %p96
      %p98 = scmp.ne.s32.totalorder %s84, %s85
      %p99 = scmp.eq.s32.totalorder %s25, 2
      %p100 = por %p98, %p99
      %p102 = scmp.ne.s32.totalorder %s85, %s101
      %p103 = scmp.eq.s32.totalorder %s25, 0
      %p104 = por %p102, %p103
      %s105 = ssub.s32 %s19, %s26
      %p106 = scmp.eq.s32.totalorder %s105, 0
      %s108 = sadd.s32 %s107, 1
      %s109 = scalar_select %p106, %s107, %s108
      %p112 = pneg %p106
      %p113 = scmp.eq.s32.totalorder %s19, 2
      %p114 = por %p112, %p113
      %p115 = scmp.ne.s32.totalorder %s107, %s110
      %p116 = scmp.eq.s32.totalorder %s19, 0
      %p117 = por %p115, %p116
      %p118 = scmp.ne.s32.totalorder %s107, %s110
      %p119 = scmp.eq.s32.totalorder %s24, 2
      %p120 = por %p118, %p119
      %p121 = scmp.ne.s32.totalorder %s110, %s111
      %p122 = scmp.eq.s32.totalorder %s24, 0
      %p123 = por %p121, %p122
      %p124 = scmp.ne.s32.totalorder %s110, %s111
      %p125 = scmp.eq.s32.totalorder %s25, 2
      %p126 = por %p124, %p125
      %p128 = scmp.ne.s32.totalorder %s111, %s127
      %p129 = scmp.eq.s32.totalorder %s25, 0
      %p130 = por %p128, %p129
      %s131 = ssub.s32 %s19, %s26
      %p132 = scmp.eq.s32.totalorder %s131, 0
      %s134 = sadd.s32 %s133, 1
      %s135 = scalar_select %p132, %s133, %s134
      %p138 = pneg %p132
      %p139 = scmp.eq.s32.totalorder %s19, 2
      %p140 = por %p138, %p139
      %p141 = scmp.ne.s32.totalorder %s133, %s136
      %p142 = scmp.eq.s32.totalorder %s19, 0
      %p143 = por %p141, %p142
      %p144 = scmp.ne.s32.totalorder %s133, %s136
      %p145 = scmp.eq.s32.totalorder %s24, 2
      %p146 = por %p144, %p145
      %p147 = scmp.ne.s32.totalorder %s136, %s137
      %p148 = scmp.eq.s32.totalorder %s24, 0
      %p149 = por %p147, %p148
      %p150 = scmp.ne.s32.totalorder %s136, %s137
      %p151 = scmp.eq.s32.totalorder %s25, 2
      %p152 = por %p150, %p151
      %p154 = scmp.ne.s32.totalorder %s137, %s153
      %p155 = scmp.eq.s32.totalorder %s25, 0
      %p156 = por %p154, %p155
      %p157 = scmp.le.s32.totalorder 1, %s19
      %p158 = scmp.lt.s32.totalorder %s19, 4
      %p159 = pnand %p157, %p158
      %p160 = pneg %p159
      // Predicated region
      $region9: #{tpu_custom_call.1} parent=5 // pred_check
        _
      $region10: #{tpu_custom_call.1} parent=5 // pred_check_branch
        %162 = sbr.rel (%p159) target = $region12
      $region11: #{tpu_custom_call.1} parent=5 // pred_region
        %s163 = ssub.s32 %s19, 1
      $region12: #{tpu_custom_call.1} parent=5 // pred_fallthru
        _
      %p164 = scmp.lt.s32.totalorder %s19, 3
      // Predicated region
      $region13: #{tpu_custom_call.1} parent=5 // pred_check
        %p165 = pneg %p164
      $region14: #{tpu_custom_call.1} parent=5 // pred_check_branch
        %167 = sbr.rel (%p165) target = $region16
      $region15: #{tpu_custom_call.1} parent=5 // pred_region
        // Predicated region
        $region17: #{tpu_custom_call.1} parent=15 // pred_check
          %p168 = pneg %p39
        $region18: #{tpu_custom_call.1} parent=15 // pred_check_branch
          %170 = sbr.rel (%p168) target = $region20
        $region19: #{tpu_custom_call.1} parent=15 // pred_region
          %s171 = sand.u32 %s29, 1
          %s172 = scalar_lea.sflag [#allocation3], %s171
          %s173 = sand.u32 %s29, 1
          %s174 = smul.addr %s173, 12
          %s175 = scalar_lea.vmem [#allocation2], %s174
          %s177 = ssub.s32 192, 192
          %178 = vsyncadd %s172, %s177
          %s179 = smul.addr %s19, 3
          %s180 = smul.addr %s179, 64
          %s181 = scalar_lea.hbm %s0, %s180
          %s182 = sshll.u32 %s175, 4
          %s183 = int_to_ptr.vmem [resolvable:$true] %s182
          %188 = dma.hbm_to_vmem [thread:$0]  %s181, 192, %s183, %s172, 64, 64, 4
        $region20: #{tpu_custom_call.1} parent=15 // pred_fallthru
          _
        // Predicated region
        $region21: #{tpu_custom_call.1} parent=15 // pred_check
          %p189 = pneg %p65
        $region22: #{tpu_custom_call.1} parent=15 // pred_check_branch
          %191 = sbr.rel (%p189) target = $region24
        $region23: #{tpu_custom_call.1} parent=15 // pred_region
          %s192 = sand.u32 %s19, 1
          %s193 = scalar_lea.sflag [#allocation6], %s192
          %s194 = sand.u32 %s55, 1
          %s195 = smul.addr %s194, 16
          %s196 = scalar_lea.vmem [#allocation5], %s195
          %s198 = ssub.s32 256, 256
          %199 = vsyncadd %s193, %s198
          %s200 = smul.addr %s19, 4
          %s201 = smul.addr %s200, 64
          %s202 = scalar_lea.hbm %s1, %s201
          %s203 = sshll.u32 %s196, 4
          %s204 = int_to_ptr.vmem [resolvable:$true] %s203
          %209 = dma.hbm_to_vmem [thread:$0]  %s202, 256, %s204, %s193, 64, 64, 4
        $region24: #{tpu_custom_call.1} parent=15 // pred_fallthru
          _
        // Predicated region
        $region25: #{tpu_custom_call.1} parent=15 // pred_check
          %p210 = pneg %p91
        $region26: #{tpu_custom_call.1} parent=15 // pred_check_branch
          %212 = sbr.rel (%p210) target = $region28
        $region27: #{tpu_custom_call.1} parent=15 // pred_region
          %s213 = sand.u32 %s19, 1
          %s214 = scalar_lea.sflag [#allocation6], %s213
          %s215 = sand.u32 %s81, 1
          %s216 = smul.addr %s215, 64
          %s217 = scalar_lea.vmem [#allocation7], %s216
          %s219 = ssub.s32 1024, 1024
          %220 = vsyncadd %s214, %s219
          %s221 = smul.addr %s19, 16
          %s222 = smul.addr %s221, 64
          %s223 = scalar_lea.hbm %s2, %s222
          %s224 = sshll.u32 %s217, 4
          %s225 = int_to_ptr.vmem [resolvable:$true] %s224
          %230 = dma.hbm_to_vmem [thread:$0]  %s223, 1024, %s225, %s214, 64, 64, 4
        $region28: #{tpu_custom_call.1} parent=15 // pred_fallthru
          _
        // Predicated region
        $region29: #{tpu_custom_call.1} parent=15 // pred_check
          %p231 = pneg %p117
        $region30: #{tpu_custom_call.1} parent=15 // pred_check_branch
          %233 = sbr.rel (%p231) target = $region32
        $region31: #{tpu_custom_call.1} parent=15 // pred_region
          %p234 = scmp.lt.s32.totalorder %s19, 2
          %s235 = scalar_select %p234, %s19, 2
          %s236 = scalar_lea.vmem %s3, %s235
        $region32: #{tpu_custom_call.1} parent=15 // pred_fallthru
          _
      $region16: #{tpu_custom_call.1} parent=5 // pred_fallthru
        _
      %p237 = scmp.le.s32.totalorder 1, %s19
      %p238 = scmp.lt.s32.totalorder %s19, 4
      %p239 = pnand %p237, %p238
      %p240 = pneg %p239
      // Predicated region
      $region33: #{tpu_custom_call.1} parent=5 // pred_check
        _
      $region34: #{tpu_custom_call.1} parent=5 // pred_check_branch
        %242 = sbr.rel (%p239) target = $region36
      $region35: #{tpu_custom_call.1} parent=5 // pred_region
        %s243 = ssub.s32 %s19, 1
        %s244 = sand.u32 %s32, 1
        %s245 = scalar_lea.sflag [#allocation3], %s244
        %s246 = sand.u32 %s32, 1
        %s247 = smul.addr %s246, 12
        %s248 = scalar_lea.vmem [#allocation2], %s247
        // Predicated region
        $region37: #{tpu_custom_call.1} parent=35 // pred_check
          %p249 = pneg %p45
        $region38: #{tpu_custom_call.1} parent=35 // pred_check_branch
          %251 = sbr.rel (%p249) target = $region40
        $region39: #{tpu_custom_call.1} parent=35 // pred_region
          %252 = dma.done %s245, 192
        $region40: #{tpu_custom_call.1} parent=35 // pred_fallthru
          _
        %s253 = sand.u32 %s24, 1
        %s254 = scalar_lea.sflag [#allocation6], %s253
        %s255 = sand.u32 %s58, 1
        %s256 = smul.addr %s255, 16
        %s257 = scalar_lea.vmem [#allocation5], %s256
        // Predicated region
        $region41: #{tpu_custom_call.1} parent=35 // pred_check
          %p258 = pneg %p71
        $region42: #{tpu_custom_call.1} parent=35 // pred_check_branch
          %260 = sbr.rel (%p258) target = $region44
        $region43: #{tpu_custom_call.1} parent=35 // pred_region
          %261 = dma.done %s254, 256
        $region44: #{tpu_custom_call.1} parent=35 // pred_fallthru
          _
        %s262 = sand.u32 %s24, 1
        %s263 = scalar_lea.sflag [#allocation6], %s262
        %s264 = sand.u32 %s84, 1
        %s265 = smul.addr %s264, 64
        %s266 = scalar_lea.vmem [#allocation7], %s265
        // Predicated region
        $region45: #{tpu_custom_call.1} parent=35 // pred_check
          %p267 = pneg %p97
        $region46: #{tpu_custom_call.1} parent=35 // pred_check_branch
          %269 = sbr.rel (%p267) target = $region48
        $region47: #{tpu_custom_call.1} parent=35 // pred_region
          %270 = dma.done %s263, 1024
        $region48: #{tpu_custom_call.1} parent=35 // pred_fallthru
          _
        %s271 = sand.u32 %s32, 1
        %s272 = scalar_lea.sflag [#allocation3], %s271
        %s273 = sand.u32 %s32, 1
        %s274 = smul.addr %s273, 12
        %s275 = scalar_lea.vmem [#allocation2], %s274
        %p276 = pneg %p45
        %p277 = pneg %p42
        %s278 = sand.u32 %s24, 1
        %s279 = scalar_lea.sflag [#allocation6], %s278
        %s280 = sand.u32 %s58, 1
        %s281 = smul.addr %s280, 16
        %s282 = scalar_lea.vmem [#allocation5], %s281
        %p283 = pneg %p71
        %p284 = pneg %p68
        %s285 = sand.u32 %s24, 1
        %s286 = scalar_lea.sflag [#allocation6], %s285
        %s287 = sand.u32 %s84, 1
        %s288 = smul.addr %s287, 64
        %s289 = scalar_lea.vmem [#allocation7], %s288
        %p290 = pneg %p97
        %p291 = pneg %p94
        %p292 = scmp.lt.s32.totalorder %s24, 2
        %s293 = scalar_select %p292, %s24, 2
        %s294 = scalar_lea.vmem %s3, %s293
        %p295 = pneg %p123
        %p296 = pneg %p120
        %p297 = pneg %p149
        %p298 = pneg %p146
        %s299 = sand.u32 %s136, 1
        %s300 = scalar_lea.sflag [#allocation4], %s299
        %s301 = sand.u32 %s136, 1
        %s302 = smul.addr %s301, 8
        %s303 = scalar_lea.vmem [#allocation8], %s302
        %p304 = scmp.lt.s32.totalorder %s24, 2
        %s305 = scalar_select %p304, %s24, 2
        %s306 = scalar_lea.vmem %s3, %s305
        %v308 = vld [vmem:[%s248] sm:$0xf]
        %v309 = vld [vmem:[%s248 + $0x4] sm:$0xf]
        %v310 = vld [vmem:[%s248 + $0x8] sm:$0xf]
        %v311 = vld [vmem:[%s257] sm:$0xf]
        %v312 = vld [vmem:[%s257 + $0x4] sm:$0xf]
        %v313 = vld [vmem:[%s257 + $0x8] sm:$0xf]
        %v314 = vld [vmem:[%s257 + $0xc] sm:$0xf]
        %v315 = vld [vmem:[%s306] sm:$0x1]
        %v317 = vlaneseq
        %v318 = vshrl.u32 %v317, 7
        %v319 = vsub.s32 0, %v318
        %v320 = vrot.slane %v315, %v319
        %v325 = vunpack.c.l.b16 %v308
        %v326 = vunpack.c.l.b16 %v309
        %v327 = vunpack.c.l.b16 %v310
        %v328 = vpack.c.b16 %v326, %v325
        %v329 = vpack.c.b16 %v327, %v327
        %v334 = vunpack.c.l.b16 %v311
        %v335 = vunpack.c.l.b16 %v312
        %v336 = vunpack.c.l.b16 %v313
        %v337 = vunpack.c.l.b16 %v314
        %v338 = vpack.c.b16 %v335, %v334
        %v339 = vpack.c.b16 %v337, %v336
        %vm342 = vcmask 261120
        %v344 = vsel %vm342, %v328, 0
        %v347 = vsel %vm342, %v329, 0
        %349 = vmatprep.subr.bf16.mxu0 0
        %350 = vmatpush1.bf16.msra.mxu0 0
        %351 = vmatprep.subr.bf16.mxu0 0
        %352 = vmatpush1.bf16.msra.mxu0 0
        %353 = vmatprep.subr.bf16.mxu0 0
        %354 = vmatpush1.bf16.msra.mxu0 0
        %355 = vmatprep.subr.bf16.mxu0 0
        %356 = vmatpush1.bf16.msra.mxu0 0
        %357 = vmatprep.subr.bf16.mxu0 0
        %358 = vmatpush1.bf16.msra.mxu0 0
        %359 = vmatprep.subr.bf16.mxu0 0
        %360 = vmatpush1.bf16.msra.mxu0 0
        %361 = vmatprep.subr.bf16.mxu0 0
        %362 = vmatpush1.bf16.msra.mxu0 %v339
        %363 = vmatprep.subr.bf16.mxu0 0
        %364 = vmatpush1.bf16.msra.mxu0 %v338
        %365 = vmatprep.subr.bf16.mxu0 0
        %366 = vmatpush2.bf16.msra.mxu0 0
        %367 = vmatprep.subr.bf16.mxu0 0
        %368 = vmatpush2.bf16.msra.mxu0 0
        %369 = vmatprep.subr.bf16.mxu0 0
        %370 = vmatpush2.bf16.msra.mxu0 0
        %371 = vmatprep.subr.bf16.mxu0 0
        %372 = vmatpush2.bf16.msra.mxu0 0
        %373 = vmatprep.subr.bf16.mxu0 0
        %374 = vmatpush2.bf16.msra.mxu0 0
        %375 = vmatprep.subr.bf16.mxu0 0
        %376 = vmatpush2.bf16.msra.mxu0 0
        %377 = vmatprep.subr.bf16.mxu0 0
        %378 = vmatpush2.bf16.msra.mxu0 0
        %379 = vmatprep.subr.bf16.mxu0 0
        %380 = vmatpush2.bf16.msra.mxu0 0
        %381 = vmatprep.mubr.bf16.mxu0 0
        %382 = vmatmul.mubr.bf16.gmra.mxu0 %v344
        %v383 = vpop.f32.mrf.mxu0
        %v384 = vadd.f32 %v320, %v383
        %v385 = vpop.f32.mrf.mxu0
        %v386 = vpop.f32.mrf.mxu0
        %v387 = vadd.f32 %v320, %v386
        %v388 = vpop.f32.mrf.mxu0
        %389 = vmatprep.mubr.bf16.mxu0 0
        %390 = vmatmul.mubr.bf16.gmra.mxu0 %v347
        %v391 = vpop.f32.mrf.mxu0
        %v392 = vadd.f32 %v320, %v391
        %v393 = vpop.f32.mrf.mxu0
        %v394 = vpop.f32.mrf.mxu0
        %v395 = vpop.f32.mrf.mxu0
        %396 = vdwg.mxu0
        %v397 = vld [vmem:[%s266] sm:$0xf]
        %v398 = vld [vmem:[%s266 + $0x4] sm:$0xf]
        %v401 = vunpack.c.l.b16 %v397
        %v402 = vunpack.c.l.b16 %v398
        %v403 = vpack.c.b16 %v402, %v401
        %vm405 = vcmask 130048
        %v407 = vsel %vm405, 0, 0
        %409 = vmatprep.subr.bf16.mxu0 0
        %410 = vmatpush1.bf16.msra.mxu0 0
        %411 = vmatprep.subr.bf16.mxu0 0
        %412 = vmatpush1.bf16.msra.mxu0 0
        %413 = vmatprep.subr.bf16.mxu0 0
        %414 = vmatpush1.bf16.msra.mxu0 0
        %415 = vmatprep.subr.bf16.mxu0 0
        %416 = vmatpush1.bf16.msra.mxu0 0
        %417 = vmatprep.subr.bf16.mxu0 0
        %418 = vmatpush1.bf16.msra.mxu0 0
        %419 = vmatprep.subr.bf16.mxu0 0
        %420 = vmatpush1.bf16.msra.mxu0 0
        %421 = vmatprep.subr.bf16.mxu0 0
        %422 = vmatpush1.bf16.msra.mxu0 0
        %423 = vmatprep.subr.bf16.mxu0 0
        %424 = vmatpush1.bf16.msra.mxu0 %v403
        %425 = vmatprep.subr.bf16.mxu0 0
        %426 = vmatpush2.bf16.msra.mxu0 0
        %427 = vmatprep.subr.bf16.mxu0 0
        %428 = vmatpush2.bf16.msra.mxu0 0
        %429 = vmatprep.subr.bf16.mxu0 0
        %430 = vmatpush2.bf16.msra.mxu0 0
        %431 = vmatprep.subr.bf16.mxu0 0
        %432 = vmatpush2.bf16.msra.mxu0 0
        %433 = vmatprep.subr.bf16.mxu0 0
        %434 = vmatpush2.bf16.msra.mxu0 0
        %435 = vmatprep.subr.bf16.mxu0 0
        %436 = vmatpush2.bf16.msra.mxu0 0
        %437 = vmatprep.subr.bf16.mxu0 0
        %438 = vmatpush2.bf16.msra.mxu0 0
        %439 = vmatprep.subr.bf16.mxu0 0
        %440 = vmatpush2.bf16.msra.mxu0 0
        %441 = vmatprep.mubr.bf16.mxu0 0
        %442 = vmatmul.mubr.bf16.gmra.mxu0 %v407
        %v443 = vpop.f32.mrf.mxu0
        %v444 = vadd.f32 0.0, %v443
        %v445 = vpop.f32.mrf.mxu0
        %v446 = vpop.f32.mrf.mxu0
        %v447 = vpop.f32.mrf.mxu0
        %448 = vdwg.mxu0
        %v449 = vadd.f32 %v384, %v444
        %s450 = scalar_lea.vmem %s266, 8 [#allocation7]
        %v451 = vld [vmem:[%s450] sm:$0xf]
        %v452 = vld [vmem:[%s450 + $0x4] sm:$0xf]
        %v455 = vunpack.c.l.b16 %v451
        %v456 = vunpack.c.l.b16 %v452
        %v457 = vpack.c.b16 %v456, %v455
        %459 = vmatprep.subr.bf16.mxu0 0
        %460 = vmatpush1.bf16.msra.mxu0 0
        %461 = vmatprep.subr.bf16.mxu0 0
        %462 = vmatpush1.bf16.msra.mxu0 0
        %463 = vmatprep.subr.bf16.mxu0 0
        %464 = vmatpush1.bf16.msra.mxu0 0
        %465 = vmatprep.subr.bf16.mxu0 0
        %466 = vmatpush1.bf16.msra.mxu0 0
        %467 = vmatprep.subr.bf16.mxu0 0
        %468 = vmatpush1.bf16.msra.mxu0 0
        %469 = vmatprep.subr.bf16.mxu0 0
        %470 = vmatpush1.bf16.msra.mxu0 0
        %471 = vmatprep.subr.bf16.mxu0 0
        %472 = vmatpush1.bf16.msra.mxu0 0
        %473 = vmatprep.subr.bf16.mxu0 0
        %474 = vmatpush1.bf16.msra.mxu0 %v457
        %475 = vmatprep.subr.bf16.mxu0 0
        %476 = vmatpush2.bf16.msra.mxu0 0
        %477 = vmatprep.subr.bf16.mxu0 0
        %478 = vmatpush2.bf16.msra.mxu0 0
        %479 = vmatprep.subr.bf16.mxu0 0
        %480 = vmatpush2.bf16.msra.mxu0 0
        %481 = vmatprep.subr.bf16.mxu0 0
        %482 = vmatpush2.bf16.msra.mxu0 0
        %483 = vmatprep.subr.bf16.mxu0 0
        %484 = vmatpush2.bf16.msra.mxu0 0
        %485 = vmatprep.subr.bf16.mxu0 0
        %486 = vmatpush2.bf16.msra.mxu0 0
        %487 = vmatprep.subr.bf16.mxu0 0
        %488 = vmatpush2.bf16.msra.mxu0 0
        %489 = vmatprep.subr.bf16.mxu0 0
        %490 = vmatpush2.bf16.msra.mxu0 0
        %491 = vmatprep.mubr.bf16.mxu0 0
        %492 = vmatmul.mubr.bf16.gmra.mxu0 %v407
        %v493 = vpop.f32.mrf.mxu0
        %v494 = vadd.f32 0.0, %v493
        %v495 = vpop.f32.mrf.mxu0
        %v496 = vpop.f32.mrf.mxu0
        %v497 = vpop.f32.mrf.mxu0
        %498 = vdwg.mxu0
        %500 = vrot.lane.b32.xlu0 %v494, 16
        %v501 = vpop.permute.xlu0 %500
        %v503 = vadd.f32 %v384, %v501
        %s504 = scalar_lea.vmem %s266, 16 [#allocation7]
        %v505 = vld [vmem:[%s504] sm:$0xf]
        %v506 = vld [vmem:[%s504 + $0x4] sm:$0xf]
        %v509 = vunpack.c.l.b16 %v505
        %v510 = vunpack.c.l.b16 %v506
        %v511 = vpack.c.b16 %v510, %v509
        %513 = vmatprep.subr.bf16.mxu0 0
        %514 = vmatpush1.bf16.msra.mxu0 0
        %515 = vmatprep.subr.bf16.mxu0 0
        %516 = vmatpush1.bf16.msra.mxu0 0
        %517 = vmatprep.subr.bf16.mxu0 0
        %518 = vmatpush1.bf16.msra.mxu0 0
        %519 = vmatprep.subr.bf16.mxu0 0
        %520 = vmatpush1.bf16.msra.mxu0 0
        %521 = vmatprep.subr.bf16.mxu0 0
        %522 = vmatpush1.bf16.msra.mxu0 0
        %523 = vmatprep.subr.bf16.mxu0 0
        %524 = vmatpush1.bf16.msra.mxu0 0
        %525 = vmatprep.subr.bf16.mxu0 0
        %526 = vmatpush1.bf16.msra.mxu0 0
        %527 = vmatprep.subr.bf16.mxu0 0
        %528 = vmatpush1.bf16.msra.mxu0 %v511
        %529 = vmatprep.subr.bf16.mxu0 0
        %530 = vmatpush2.bf16.msra.mxu0 0
        %531 = vmatprep.subr.bf16.mxu0 0
        %532 = vmatpush2.bf16.msra.mxu0 0
        %533 = vmatprep.subr.bf16.mxu0 0
        %534 = vmatpush2.bf16.msra.mxu0 0
        %535 = vmatprep.subr.bf16.mxu0 0
        %536 = vmatpush2.bf16.msra.mxu0 0
        %537 = vmatprep.subr.bf16.mxu0 0
        %538 = vmatpush2.bf16.msra.mxu0 0
        %539 = vmatprep.subr.bf16.mxu0 0
        %540 = vmatpush2.bf16.msra.mxu0 0
        %541 = vmatprep.subr.bf16.mxu0 0
        %542 = vmatpush2.bf16.msra.mxu0 0
        %543 = vmatprep.subr.bf16.mxu0 0
        %544 = vmatpush2.bf16.msra.mxu0 0
        %545 = vmatprep.mubr.bf16.mxu0 0
        %546 = vmatmul.mubr.bf16.gmra.mxu0 %v407
        %v547 = vpop.f32.mrf.mxu0
        %v548 = vadd.f32 0.0, %v547
        %v549 = vpop.f32.mrf.mxu0
        %v550 = vpop.f32.mrf.mxu0
        %v551 = vpop.f32.mrf.mxu0
        %552 = vdwg.mxu0
        %554 = vrot.lane.b32.xlu0 %v548, 32
        %v555 = vpop.permute.xlu0 %554
        %v557 = vadd.f32 %v384, %v555
        %s558 = scalar_lea.vmem %s266, 24 [#allocation7]
        %v559 = vld [vmem:[%s558] sm:$0xf]
        %v560 = vld [vmem:[%s558 + $0x4] sm:$0xf]
        %v563 = vunpack.c.l.b16 %v559
        %v564 = vunpack.c.l.b16 %v560
        %v565 = vpack.c.b16 %v564, %v563
        %567 = vmatprep.subr.bf16.mxu0 0
        %568 = vmatpush1.bf16.msra.mxu0 0
        %569 = vmatprep.subr.bf16.mxu0 0
        %570 = vmatpush1.bf16.msra.mxu0 0
        %571 = vmatprep.subr.bf16.mxu0 0
        %572 = vmatpush1.bf16.msra.mxu0 0
        %573 = vmatprep.subr.bf16.mxu0 0
        %574 = vmatpush1.bf16.msra.mxu0 0
        %575 = vmatprep.subr.bf16.mxu0 0
        %576 = vmatpush1.bf16.msra.mxu0 0
        %577 = vmatprep.subr.bf16.mxu0 0
        %578 = vmatpush1.bf16.msra.mxu0 0
        %579 = vmatprep.subr.bf16.mxu0 0
        %580 = vmatpush1.bf16.msra.mxu0 0
        %581 = vmatprep.subr.bf16.mxu0 0
        %582 = vmatpush1.bf16.msra.mxu0 %v565
        %583 = vmatprep.subr.bf16.mxu0 0
        %584 = vmatpush2.bf16.msra.mxu0 0
        %585 = vmatprep.subr.bf16.mxu0 0
        %586 = vmatpush2.bf16.msra.mxu0 0
        %587 = vmatprep.subr.bf16.mxu0 0
        %588 = vmatpush2.bf16.msra.mxu0 0
        %589 = vmatprep.subr.bf16.mxu0 0
        %590 = vmatpush2.bf16.msra.mxu0 0
        %591 = vmatprep.subr.bf16.mxu0 0
        %592 = vmatpush2.bf16.msra.mxu0 0
        %593 = vmatprep.subr.bf16.mxu0 0
        %594 = vmatpush2.bf16.msra.mxu0 0
        %595 = vmatprep.subr.bf16.mxu0 0
        %596 = vmatpush2.bf16.msra.mxu0 0
        %597 = vmatprep.subr.bf16.mxu0 0
        %598 = vmatpush2.bf16.msra.mxu0 0
        %599 = vmatprep.mubr.bf16.mxu0 0
        %600 = vmatmul.mubr.bf16.gmra.mxu0 %v407
        %v601 = vpop.f32.mrf.mxu0
        %v602 = vadd.f32 0.0, %v601
        %v603 = vpop.f32.mrf.mxu0
        %v604 = vpop.f32.mrf.mxu0
        %v605 = vpop.f32.mrf.mxu0
        %606 = vdwg.mxu0
        %608 = vrot.lane.b32.xlu0 %v602, 48
        %v609 = vpop.permute.xlu0 %608
        %v611 = vadd.f32 %v384, %v609
        %v612 = vxor.u32 %v449, 2147483648
        %v613 = vmul.f32 %v612, 1.442695
        %v614 = vpow.pop %v613
        %v615 = vadd.f32 %v614, 1.0
        %v616 = vrcp.pop %v615
        %v617 = vmul.f32 1.0, %v616
        %v618 = vxor.u32 %v503, 2147483648
        %v619 = vmul.f32 %v618, 1.442695
        %v620 = vpow.pop %v619
        %v621 = vadd.f32 %v620, 1.0
        %v622 = vrcp.pop %v621
        %v623 = vmul.f32 1.0, %v622
        %v624 = vtanh.pop %v557
        %v625 = vxor.u32 %v611, 2147483648
        %v626 = vmul.f32 %v625, 1.442695
        %v627 = vpow.pop %v626
        %v628 = vadd.f32 %v627, 1.0
        %v629 = vrcp.pop %v628
        %v630 = vmul.f32 1.0, %v629
        %v631 = vmul.f32 %v623, 0.0
        %633 = vrot.lane.b32.xlu0 %v624, 96
        %v634 = vpop.permute.xlu0 %633
        %v636 = vmul.f32 %v617, %v634
        %638 = vrot.lane.b32.xlu0 %v636, 16
        %v639 = vpop.permute.xlu0 %638
        %v641 = vadd.f32 %v631, %v639
        %v642 = vtanh.pop %v641
        %644 = vrot.lane.b32.xlu0 %v642, 32
        %v645 = vpop.permute.xlu0 %644
        %v647 = vmul.f32 %v630, %v645
        %s648 = scalar_lea.vmem %s266, 32 [#allocation7]
        %v649 = vld [vmem:[%s648] sm:$0xf]
        %v650 = vld [vmem:[%s648 + $0x4] sm:$0xf]
        %v653 = vunpack.c.l.b16 %v649
        %v654 = vunpack.c.l.b16 %v650
        %v655 = vpack.c.b16 %v654, %v653
        %657 = vmatprep.subr.bf16.mxu0 0
        %658 = vmatpush1.bf16.msra.mxu0 0
        %659 = vmatprep.subr.bf16.mxu0 0
        %660 = vmatpush1.bf16.msra.mxu0 0
        %661 = vmatprep.subr.bf16.mxu0 0
        %662 = vmatpush1.bf16.msra.mxu0 0
        %663 = vmatprep.subr.bf16.mxu0 0
        %664 = vmatpush1.bf16.msra.mxu0 0
        %665 = vmatprep.subr.bf16.mxu0 0
        %666 = vmatpush1.bf16.msra.mxu0 0
        %667 = vmatprep.subr.bf16.mxu0 0
        %668 = vmatpush1.bf16.msra.mxu0 0
        %669 = vmatprep.subr.bf16.mxu0 0
        %670 = vmatpush1.bf16.msra.mxu0 0
        %671 = vmatprep.subr.bf16.mxu0 0
        %672 = vmatpush1.bf16.msra.mxu0 %v655
        %673 = vmatprep.subr.bf16.mxu0 0
        %674 = vmatpush2.bf16.msra.mxu0 0
        %675 = vmatprep.subr.bf16.mxu0 0
        %676 = vmatpush2.bf16.msra.mxu0 0
        %677 = vmatprep.subr.bf16.mxu0 0
        %678 = vmatpush2.bf16.msra.mxu0 0
        %679 = vmatprep.subr.bf16.mxu0 0
        %680 = vmatpush2.bf16.msra.mxu0 0
        %681 = vmatprep.subr.bf16.mxu0 0
        %682 = vmatpush2.bf16.msra.mxu0 0
        %683 = vmatprep.subr.bf16.mxu0 0
        %684 = vmatpush2.bf16.msra.mxu0 0
        %685 = vmatprep.subr.bf16.mxu0 0
        %686 = vmatpush2.bf16.msra.mxu0 0
        %687 = vmatprep.subr.bf16.mxu0 0
        %688 = vmatpush2.bf16.msra.mxu0 0
        %689 = vmatprep.mubr.bf16.mxu0 0
        %690 = vmatmul.mubr.bf16.gmra.mxu0 %v407
        %v691 = vpop.f32.mrf.mxu0
        %v692 = vadd.f32 0.0, %v691
        %v693 = vpop.f32.mrf.mxu0
        %v694 = vpop.f32.mrf.mxu0
        %v695 = vpop.f32.mrf.mxu0
        %696 = vdwg.mxu0
        %698 = vrot.lane.b32.xlu0 %v692, 64
        %v699 = vpop.permute.xlu0 %698
        %v701 = vadd.f32 %v392, %v699
        %s702 = scalar_lea.vmem %s266, 40 [#allocation7]
        %v703 = vld [vmem:[%s702] sm:$0xf]
        %v704 = vld [vmem:[%s702 + $0x4] sm:$0xf]
        %v707 = vunpack.c.l.b16 %v703
        %v708 = vunpack.c.l.b16 %v704
        %v709 = vpack.c.b16 %v708, %v707
        %711 = vmatprep.subr.bf16.mxu0 0
        %712 = vmatpush1.bf16.msra.mxu0 0
        %713 = vmatprep.subr.bf16.mxu0 0
        %714 = vmatpush1.bf16.msra.mxu0 0
        %715 = vmatprep.subr.bf16.mxu0 0
        %716 = vmatpush1.bf16.msra.mxu0 0
        %717 = vmatprep.subr.bf16.mxu0 0
        %718 = vmatpush1.bf16.msra.mxu0 0
        %719 = vmatprep.subr.bf16.mxu0 0
        %720 = vmatpush1.bf16.msra.mxu0 0
        %721 = vmatprep.subr.bf16.mxu0 0
        %722 = vmatpush1.bf16.msra.mxu0 0
        %723 = vmatprep.subr.bf16.mxu0 0
        %724 = vmatpush1.bf16.msra.mxu0 0
        %725 = vmatprep.subr.bf16.mxu0 0
        %726 = vmatpush1.bf16.msra.mxu0 %v709
        %727 = vmatprep.subr.bf16.mxu0 0
        %728 = vmatpush2.bf16.msra.mxu0 0
        %729 = vmatprep.subr.bf16.mxu0 0
        %730 = vmatpush2.bf16.msra.mxu0 0
        %731 = vmatprep.subr.bf16.mxu0 0
        %732 = vmatpush2.bf16.msra.mxu0 0
        %733 = vmatprep.subr.bf16.mxu0 0
        %734 = vmatpush2.bf16.msra.mxu0 0
        %735 = vmatprep.subr.bf16.mxu0 0
        %736 = vmatpush2.bf16.msra.mxu0 0
        %737 = vmatprep.subr.bf16.mxu0 0
        %738 = vmatpush2.bf16.msra.mxu0 0
        %739 = vmatprep.subr.bf16.mxu0 0
        %740 = vmatpush2.bf16.msra.mxu0 0
        %741 = vmatprep.subr.bf16.mxu0 0
        %742 = vmatpush2.bf16.msra.mxu0 0
        %743 = vmatprep.mubr.bf16.mxu0 0
        %744 = vmatmul.mubr.bf16.gmra.mxu0 %v407
        %v745 = vpop.f32.mrf.mxu0
        %v746 = vadd.f32 0.0, %v745
        %v747 = vpop.f32.mrf.mxu0
        %v748 = vpop.f32.mrf.mxu0
        %v749 = vpop.f32.mrf.mxu0
        %750 = vdwg.mxu0
        %752 = vrot.lane.b32.xlu0 %v746, 80
        %v753 = vpop.permute.xlu0 %752
        %v755 = vadd.f32 %v392, %v753
        %s756 = scalar_lea.vmem %s266, 48 [#allocation7]
        %v757 = vld [vmem:[%s756] sm:$0xf]
        %v758 = vld [vmem:[%s756 + $0x4] sm:$0xf]
        %v761 = vunpack.c.l.b16 %v757
        %v762 = vunpack.c.l.b16 %v758
        %v763 = vpack.c.b16 %v762, %v761
        %765 = vmatprep.subr.bf16.mxu0 0
        %766 = vmatpush1.bf16.msra.mxu0 0
        %767 = vmatprep.subr.bf16.mxu0 0
        %768 = vmatpush1.bf16.msra.mxu0 0
        %769 = vmatprep.subr.bf16.mxu0 0
        %770 = vmatpush1.bf16.msra.mxu0 0
        %771 = vmatprep.subr.bf16.mxu0 0
        %772 = vmatpush1.bf16.msra.mxu0 0
        %773 = vmatprep.subr.bf16.mxu0 0
        %774 = vmatpush1.bf16.msra.mxu0 0
        %775 = vmatprep.subr.bf16.mxu0 0
        %776 = vmatpush1.bf16.msra.mxu0 0
        %777 = vmatprep.subr.bf16.mxu0 0
        %778 = vmatpush1.bf16.msra.mxu0 0
        %779 = vmatprep.subr.bf16.mxu0 0
        %780 = vmatpush1.bf16.msra.mxu0 %v763
        %781 = vmatprep.subr.bf16.mxu0 0
        %782 = vmatpush2.bf16.msra.mxu0 0
        %783 = vmatprep.subr.bf16.mxu0 0
        %784 = vmatpush2.bf16.msra.mxu0 0
        %785 = vmatprep.subr.bf16.mxu0 0
        %786 = vmatpush2.bf16.msra.mxu0 0
        %787 = vmatprep.subr.bf16.mxu0 0
        %788 = vmatpush2.bf16.msra.mxu0 0
        %789 = vmatprep.subr.bf16.mxu0 0
        %790 = vmatpush2.bf16.msra.mxu0 0
        %791 = vmatprep.subr.bf16.mxu0 0
        %792 = vmatpush2.bf16.msra.mxu0 0
        %793 = vmatprep.subr.bf16.mxu0 0
        %794 = vmatpush2.bf16.msra.mxu0 0
        %795 = vmatprep.subr.bf16.mxu0 0
        %796 = vmatpush2.bf16.msra.mxu0 0
        %797 = vmatprep.mubr.bf16.mxu0 0
        %798 = vmatmul.mubr.bf16.gmra.mxu0 %v407
        %v799 = vpop.f32.mrf.mxu0
        %v800 = vadd.f32 0.0, %v799
        %v801 = vpop.f32.mrf.mxu0
        %v802 = vpop.f32.mrf.mxu0
        %v803 = vpop.f32.mrf.mxu0
        %804 = vdwg.mxu0
        %806 = vrot.lane.b32.xlu0 %v800, 96
        %v807 = vpop.permute.xlu0 %806
        %v809 = vadd.f32 %v392, %v807
        %s810 = scalar_lea.vmem %s266, 56 [#allocation7]
        %v811 = vld [vmem:[%s810] sm:$0xf]
        %v812 = vld [vmem:[%s810 + $0x4] sm:$0xf]
        %v815 = vunpack.c.l.b16 %v811
        %v816 = vunpack.c.l.b16 %v812
        %v817 = vpack.c.b16 %v816, %v815
        %819 = vmatprep.subr.bf16.mxu0 0
        %820 = vmatpush1.bf16.msra.mxu0 0
        %821 = vmatprep.subr.bf16.mxu0 0
        %822 = vmatpush1.bf16.msra.mxu0 0
        %823 = vmatprep.subr.bf16.mxu0 0
        %824 = vmatpush1.bf16.msra.mxu0 0
        %825 = vmatprep.subr.bf16.mxu0 0
        %826 = vmatpush1.bf16.msra.mxu0 0
        %827 = vmatprep.subr.bf16.mxu0 0
        %828 = vmatpush1.bf16.msra.mxu0 0
        %829 = vmatprep.subr.bf16.mxu0 0
        %830 = vmatpush1.bf16.msra.mxu0 0
        %831 = vmatprep.subr.bf16.mxu0 0
        %832 = vmatpush1.bf16.msra.mxu0 0
        %833 = vmatprep.subr.bf16.mxu0 0
        %834 = vmatpush1.bf16.msra.mxu0 %v817
        %835 = vmatprep.subr.bf16.mxu0 0
        %836 = vmatpush2.bf16.msra.mxu0 0
        %837 = vmatprep.subr.bf16.mxu0 0
        %838 = vmatpush2.bf16.msra.mxu0 0
        %839 = vmatprep.subr.bf16.mxu0 0
        %840 = vmatpush2.bf16.msra.mxu0 0
        %841 = vmatprep.subr.bf16.mxu0 0
        %842 = vmatpush2.bf16.msra.mxu0 0
        %843 = vmatprep.subr.bf16.mxu0 0
        %844 = vmatpush2.bf16.msra.mxu0 0
        %845 = vmatprep.subr.bf16.mxu0 0
        %846 = vmatpush2.bf16.msra.mxu0 0
        %847 = vmatprep.subr.bf16.mxu0 0
        %848 = vmatpush2.bf16.msra.mxu0 0
        %849 = vmatprep.subr.bf16.mxu0 0
        %850 = vmatpush2.bf16.msra.mxu0 0
        %851 = vmatprep.mubr.bf16.mxu0 0
        %852 = vmatmul.mubr.bf16.gmra.mxu0 %v407
        %v853 = vpop.f32.mrf.mxu0
        %v854 = vadd.f32 0.0, %v853
        %v855 = vpop.f32.mrf.mxu0
        %v856 = vpop.f32.mrf.mxu0
        %v857 = vpop.f32.mrf.mxu0
        %858 = vdwg.mxu0
        %860 = vrot.lane.b32.xlu0 %v854, 112
        %v861 = vpop.permute.xlu0 %860
        %v863 = vadd.f32 %v392, %v861
        %v864 = vxor.u32 %v701, 2147483648
        %v865 = vmul.f32 %v864, 1.442695
        %v866 = vpow.pop %v865
        %v867 = vadd.f32 %v866, 1.0
        %v868 = vrcp.pop %v867
        %v869 = vmul.f32 1.0, %v868
        %v870 = vxor.u32 %v755, 2147483648
        %v871 = vmul.f32 %v870, 1.442695
        %v872 = vpow.pop %v871
        %v873 = vadd.f32 %v872, 1.0
        %v874 = vrcp.pop %v873
        %v875 = vmul.f32 1.0, %v874
        %v876 = vtanh.pop %v809
        %v877 = vxor.u32 %v863, 2147483648
        %v878 = vmul.f32 %v877, 1.442695
        %v879 = vpow.pop %v878
        %v880 = vadd.f32 %v879, 1.0
        %v881 = vrcp.pop %v880
        %v882 = vmul.f32 1.0, %v881
        %v883 = vmul.f32 %v875, 0.0
        %885 = vrot.lane.b32.xlu0 %v876, 96
        %v886 = vpop.permute.xlu0 %885
        %v888 = vmul.f32 %v869, %v886
        %890 = vrot.lane.b32.xlu0 %v888, 16
        %v891 = vpop.permute.xlu0 %890
        %v893 = vadd.f32 %v883, %v891
        %v894 = vtanh.pop %v893
        %896 = vrot.lane.b32.xlu0 %v894, 32
        %v897 = vpop.permute.xlu0 %896
        %v899 = vmul.f32 %v882, %v897
        %v900 = vadd.f32 %v647, 0.0
        %v901 = vadd.f32 %v899, 0.0
        %v902 = vpack.c.bf16 %v647, %v647
        %904 = vrot.lane.b32.xlu0 %v902, 80
        %v905 = vpop.permute.xlu0 %904
        %v907 = vsel %vm405, %v905, 0
        %909 = vmatprep.subr.bf16.mxu0 0
        %910 = vmatpush1.bf16.msra.mxu0 0
        %911 = vmatprep.subr.bf16.mxu0 0
        %912 = vmatpush1.bf16.msra.mxu0 0
        %913 = vmatprep.subr.bf16.mxu0 0
        %914 = vmatpush1.bf16.msra.mxu0 0
        %915 = vmatprep.subr.bf16.mxu0 0
        %916 = vmatpush1.bf16.msra.mxu0 0
        %917 = vmatprep.subr.bf16.mxu0 0
        %918 = vmatpush1.bf16.msra.mxu0 0
        %919 = vmatprep.subr.bf16.mxu0 0
        %920 = vmatpush1.bf16.msra.mxu0 0
        %921 = vmatprep.subr.bf16.mxu0 0
        %922 = vmatpush1.bf16.msra.mxu0 0
        %923 = vmatprep.subr.bf16.mxu0 0
        %924 = vmatpush1.bf16.msra.mxu0 %v403
        %925 = vmatprep.subr.bf16.mxu0 0
        %926 = vmatpush2.bf16.msra.mxu0 0
        %927 = vmatprep.subr.bf16.mxu0 0
        %928 = vmatpush2.bf16.msra.mxu0 0
        %929 = vmatprep.subr.bf16.mxu0 0
        %930 = vmatpush2.bf16.msra.mxu0 0
        %931 = vmatprep.subr.bf16.mxu0 0
        %932 = vmatpush2.bf16.msra.mxu0 0
        %933 = vmatprep.subr.bf16.mxu0 0
        %934 = vmatpush2.bf16.msra.mxu0 0
        %935 = vmatprep.subr.bf16.mxu0 0
        %936 = vmatpush2.bf16.msra.mxu0 0
        %937 = vmatprep.subr.bf16.mxu0 0
        %938 = vmatpush2.bf16.msra.mxu0 0
        %939 = vmatprep.subr.bf16.mxu0 0
        %940 = vmatpush2.bf16.msra.mxu0 0
        %941 = vmatprep.mubr.bf16.mxu0 0
        %942 = vmatmul.mubr.bf16.gmra.mxu0 %v907
        %v943 = vpop.f32.mrf.mxu0
        %v944 = vadd.f32 0.0, %v943
        %v945 = vpop.f32.mrf.mxu0
        %v946 = vpop.f32.mrf.mxu0
        %v947 = vpop.f32.mrf.mxu0
        %948 = vdwg.mxu0
        %v949 = vadd.f32 %v387, %v944
        %950 = vmatprep.subr.bf16.mxu0 0
        %951 = vmatpush1.bf16.msra.mxu0 0
        %952 = vmatprep.subr.bf16.mxu0 0
        %953 = vmatpush1.bf16.msra.mxu0 0
        %954 = vmatprep.subr.bf16.mxu0 0
        %955 = vmatpush1.bf16.msra.mxu0 0
        %956 = vmatprep.subr.bf16.mxu0 0
        %957 = vmatpush1.bf16.msra.mxu0 0
        %958 = vmatprep.subr.bf16.mxu0 0
        %959 = vmatpush1.bf16.msra.mxu0 0
        %960 = vmatprep.subr.bf16.mxu0 0
        %961 = vmatpush1.bf16.msra.mxu0 0
        %962 = vmatprep.subr.bf16.mxu0 0
        %963 = vmatpush1.bf16.msra.mxu0 0
        %964 = vmatprep.subr.bf16.mxu0 0
        %965 = vmatpush1.bf16.msra.mxu0 %v457
        %966 = vmatprep.subr.bf16.mxu0 0
        %967 = vmatpush2.bf16.msra.mxu0 0
        %968 = vmatprep.subr.bf16.mxu0 0
        %969 = vmatpush2.bf16.msra.mxu0 0
        %970 = vmatprep.subr.bf16.mxu0 0
        %971 = vmatpush2.bf16.msra.mxu0 0
        %972 = vmatprep.subr.bf16.mxu0 0
        %973 = vmatpush2.bf16.msra.mxu0 0
        %974 = vmatprep.subr.bf16.mxu0 0
        %975 = vmatpush2.bf16.msra.mxu0 0
        %976 = vmatprep.subr.bf16.mxu0 0
        %977 = vmatpush2.bf16.msra.mxu0 0
        %978 = vmatprep.subr.bf16.mxu0 0
        %979 = vmatpush2.bf16.msra.mxu0 0
        %980 = vmatprep.subr.bf16.mxu0 0
        %981 = vmatpush2.bf16.msra.mxu0 0
        %982 = vmatprep.mubr.bf16.mxu0 0
        %983 = vmatmul.mubr.bf16.gmra.mxu0 %v907
        %v984 = vpop.f32.mrf.mxu0
        %v985 = vadd.f32 0.0, %v984
        %v986 = vpop.f32.mrf.mxu0
        %v987 = vpop.f32.mrf.mxu0
        %v988 = vpop.f32.mrf.mxu0
        %989 = vdwg.mxu0
        %991 = vrot.lane.b32.xlu0 %v985, 16
        %v992 = vpop.permute.xlu0 %991
        %v994 = vadd.f32 %v387, %v992
        %995 = vmatprep.subr.bf16.mxu0 0
        %996 = vmatpush1.bf16.msra.mxu0 0
        %997 = vmatprep.subr.bf16.mxu0 0
        %998 = vmatpush1.bf16.msra.mxu0 0
        %999 = vmatprep.subr.bf16.mxu0 0
        %1000 = vmatpush1.bf16.msra.mxu0 0
        %1001 = vmatprep.subr.bf16.mxu0 0
        %1002 = vmatpush1.bf16.msra.mxu0 0
        %1003 = vmatprep.subr.bf16.mxu0 0
        %1004 = vmatpush1.bf16.msra.mxu0 0
        %1005 = vmatprep.subr.bf16.mxu0 0
        %1006 = vmatpush1.bf16.msra.mxu0 0
        %1007 = vmatprep.subr.bf16.mxu0 0
        %1008 = vmatpush1.bf16.msra.mxu0 0
        %1009 = vmatprep.subr.bf16.mxu0 0
        %1010 = vmatpush1.bf16.msra.mxu0 %v511
        %1011 = vmatprep.subr.bf16.mxu0 0
        %1012 = vmatpush2.bf16.msra.mxu0 0
        %1013 = vmatprep.subr.bf16.mxu0 0
        %1014 = vmatpush2.bf16.msra.mxu0 0
        %1015 = vmatprep.subr.bf16.mxu0 0
        %1016 = vmatpush2.bf16.msra.mxu0 0
        %1017 = vmatprep.subr.bf16.mxu0 0
        %1018 = vmatpush2.bf16.msra.mxu0 0
        %1019 = vmatprep.subr.bf16.mxu0 0
        %1020 = vmatpush2.bf16.msra.mxu0 0
        %1021 = vmatprep.subr.bf16.mxu0 0
        %1022 = vmatpush2.bf16.msra.mxu0 0
        %1023 = vmatprep.subr.bf16.mxu0 0
        %1024 = vmatpush2.bf16.msra.mxu0 0
        %1025 = vmatprep.subr.bf16.mxu0 0
        %1026 = vmatpush2.bf16.msra.mxu0 0
        %1027 = vmatprep.mubr.bf16.mxu0 0
        %1028 = vmatmul.mubr.bf16.gmra.mxu0 %v907
        %v1029 = vpop.f32.mrf.mxu0
        %v1030 = vadd.f32 0.0, %v1029
        %v1031 = vpop.f32.mrf.mxu0
        %v1032 = vpop.f32.mrf.mxu0
        %v1033 = vpop.f32.mrf.mxu0
        %1034 = vdwg.mxu0
        %1036 = vrot.lane.b32.xlu0 %v1030, 32
        %v1037 = vpop.permute.xlu0 %1036
        %v1039 = vadd.f32 %v387, %v1037
        %1040 = vmatprep.subr.bf16.mxu0 0
        %1041 = vmatpush1.bf16.msra.mxu0 0
        %1042 = vmatprep.subr.bf16.mxu0 0
        %1043 = vmatpush1.bf16.msra.mxu0 0
        %1044 = vmatprep.subr.bf16.mxu0 0
        %1045 = vmatpush1.bf16.msra.mxu0 0
        %1046 = vmatprep.subr.bf16.mxu0 0
        %1047 = vmatpush1.bf16.msra.mxu0 0
        %1048 = vmatprep.subr.bf16.mxu0 0
        %1049 = vmatpush1.bf16.msra.mxu0 0
        %1050 = vmatprep.subr.bf16.mxu0 0
        %1051 = vmatpush1.bf16.msra.mxu0 0
        %1052 = vmatprep.subr.bf16.mxu0 0
        %1053 = vmatpush1.bf16.msra.mxu0 0
        %1054 = vmatprep.subr.bf16.mxu0 0
        %1055 = vmatpush1.bf16.msra.mxu0 %v565
        %1056 = vmatprep.subr.bf16.mxu0 0
        %1057 = vmatpush2.bf16.msra.mxu0 0
        %1058 = vmatprep.subr.bf16.mxu0 0
        %1059 = vmatpush2.bf16.msra.mxu0 0
        %1060 = vmatprep.subr.bf16.mxu0 0
        %1061 = vmatpush2.bf16.msra.mxu0 0
        %1062 = vmatprep.subr.bf16.mxu0 0
        %1063 = vmatpush2.bf16.msra.mxu0 0
        %1064 = vmatprep.subr.bf16.mxu0 0
        %1065 = vmatpush2.bf16.msra.mxu0 0
        %1066 = vmatprep.subr.bf16.mxu0 0
        %1067 = vmatpush2.bf16.msra.mxu0 0
        %1068 = vmatprep.subr.bf16.mxu0 0
        %1069 = vmatpush2.bf16.msra.mxu0 0
        %1070 = vmatprep.subr.bf16.mxu0 0
        %1071 = vmatpush2.bf16.msra.mxu0 0
        %1072 = vmatprep.mubr.bf16.mxu0 0
        %1073 = vmatmul.mubr.bf16.gmra.mxu0 %v907
        %v1074 = vpop.f32.mrf.mxu0
        %v1075 = vadd.f32 0.0, %v1074
        %v1076 = vpop.f32.mrf.mxu0
        %v1077 = vpop.f32.mrf.mxu0
        %v1078 = vpop.f32.mrf.mxu0
        %1079 = vdwg.mxu0
        %1081 = vrot.lane.b32.xlu0 %v1075, 48
        %v1082 = vpop.permute.xlu0 %1081
        %v1084 = vadd.f32 %v387, %v1082
        %v1085 = vxor.u32 %v949, 2147483648
        %v1086 = vmul.f32 %v1085, 1.442695
        %v1087 = vpow.pop %v1086
        %v1088 = vadd.f32 %v1087, 1.0
        %v1089 = vrcp.pop %v1088
        %v1090 = vmul.f32 1.0, %v1089
        %v1091 = vxor.u32 %v994, 2147483648
        %v1092 = vmul.f32 %v1091, 1.442695
        %v1093 = vpow.pop %v1092
        %v1094 = vadd.f32 %v1093, 1.0
        %v1095 = vrcp.pop %v1094
        %v1096 = vmul.f32 1.0, %v1095
        %v1097 = vtanh.pop %v1039
        %v1098 = vxor.u32 %v1084, 2147483648
        %v1099 = vmul.f32 %v1098, 1.442695
        %v1100 = vpow.pop %v1099
        %v1101 = vadd.f32 %v1100, 1.0
        %v1102 = vrcp.pop %v1101
        %v1103 = vmul.f32 1.0, %v1102
        %v1104 = vmul.f32 %v1096, %v641
        %1106 = vrot.lane.b32.xlu0 %v1097, 96
        %v1107 = vpop.permute.xlu0 %1106
        %v1109 = vmul.f32 %v1090, %v1107
        %1111 = vrot.lane.b32.xlu0 %v1109, 16
        %v1112 = vpop.permute.xlu0 %1111
        %v1114 = vadd.f32 %v1104, %v1112
        %v1115 = vtanh.pop %v1114
        %1117 = vrot.lane.b32.xlu0 %v1115, 32
        %v1118 = vpop.permute.xlu0 %1117
        %v1120 = vmul.f32 %v1103, %v1118
        %v1121 = vpack.c.bf16 %v899, %v899
        %1123 = vrot.lane.b32.xlu0 %v1121, 16
        %v1124 = vpop.permute.xlu0 %1123
        %v1126 = vsel %vm405, %v1124, 0
        %1128 = vmatprep.subr.bf16.mxu0 0
        %1129 = vmatpush1.bf16.msra.mxu0 0
        %1130 = vmatprep.subr.bf16.mxu0 0
        %1131 = vmatpush1.bf16.msra.mxu0 0
        %1132 = vmatprep.subr.bf16.mxu0 0
        %1133 = vmatpush1.bf16.msra.mxu0 0
        %1134 = vmatprep.subr.bf16.mxu0 0
        %1135 = vmatpush1.bf16.msra.mxu0 0
        %1136 = vmatprep.subr.bf16.mxu0 0
        %1137 = vmatpush1.bf16.msra.mxu0 0
        %1138 = vmatprep.subr.bf16.mxu0 0
        %1139 = vmatpush1.bf16.msra.mxu0 0
        %1140 = vmatprep.subr.bf16.mxu0 0
        %1141 = vmatpush1.bf16.msra.mxu0 0
        %1142 = vmatprep.subr.bf16.mxu0 0
        %1143 = vmatpush1.bf16.msra.mxu0 %v655
        %1144 = vmatprep.subr.bf16.mxu0 0
        %1145 = vmatpush2.bf16.msra.mxu0 0
        %1146 = vmatprep.subr.bf16.mxu0 0
        %1147 = vmatpush2.bf16.msra.mxu0 0
        %1148 = vmatprep.subr.bf16.mxu0 0
        %1149 = vmatpush2.bf16.msra.mxu0 0
        %1150 = vmatprep.subr.bf16.mxu0 0
        %1151 = vmatpush2.bf16.msra.mxu0 0
        %1152 = vmatprep.subr.bf16.mxu0 0
        %1153 = vmatpush2.bf16.msra.mxu0 0
        %1154 = vmatprep.subr.bf16.mxu0 0
        %1155 = vmatpush2.bf16.msra.mxu0 0
        %1156 = vmatprep.subr.bf16.mxu0 0
        %1157 = vmatpush2.bf16.msra.mxu0 0
        %1158 = vmatprep.subr.bf16.mxu0 0
        %1159 = vmatpush2.bf16.msra.mxu0 0
        %1160 = vmatprep.mubr.bf16.mxu0 0
        %1161 = vmatmul.mubr.bf16.gmra.mxu0 %v1126
        %v1162 = vpop.f32.mrf.mxu0
        %v1163 = vadd.f32 0.0, %v1162
        %v1164 = vpop.f32.mrf.mxu0
        %v1165 = vpop.f32.mrf.mxu0
        %v1166 = vpop.f32.mrf.mxu0
        %1167 = vdwg.mxu0
        %1169 = vrot.lane.b32.xlu0 %v1163, 64
        %v1170 = vpop.permute.xlu0 %1169
        %v1172 = vadd.f32 %v387, %v1170
        %1173 = vmatprep.subr.bf16.mxu0 0
        %1174 = vmatpush1.bf16.msra.mxu0 0
        %1175 = vmatprep.subr.bf16.mxu0 0
        %1176 = vmatpush1.bf16.msra.mxu0 0
        %1177 = vmatprep.subr.bf16.mxu0 0
        %1178 = vmatpush1.bf16.msra.mxu0 0
        %1179 = vmatprep.subr.bf16.mxu0 0
        %1180 = vmatpush1.bf16.msra.mxu0 0
        %1181 = vmatprep.subr.bf16.mxu0 0
        %1182 = vmatpush1.bf16.msra.mxu0 0
        %1183 = vmatprep.subr.bf16.mxu0 0
        %1184 = vmatpush1.bf16.msra.mxu0 0
        %1185 = vmatprep.subr.bf16.mxu0 0
        %1186 = vmatpush1.bf16.msra.mxu0 0
        %1187 = vmatprep.subr.bf16.mxu0 0
        %1188 = vmatpush1.bf16.msra.mxu0 %v709
        %1189 = vmatprep.subr.bf16.mxu0 0
        %1190 = vmatpush2.bf16.msra.mxu0 0
        %1191 = vmatprep.subr.bf16.mxu0 0
        %1192 = vmatpush2.bf16.msra.mxu0 0
        %1193 = vmatprep.subr.bf16.mxu0 0
        %1194 = vmatpush2.bf16.msra.mxu0 0
        %1195 = vmatprep.subr.bf16.mxu0 0
        %1196 = vmatpush2.bf16.msra.mxu0 0
        %1197 = vmatprep.subr.bf16.mxu0 0
        %1198 = vmatpush2.bf16.msra.mxu0 0
        %1199 = vmatprep.subr.bf16.mxu0 0
        %1200 = vmatpush2.bf16.msra.mxu0 0
        %1201 = vmatprep.subr.bf16.mxu0 0
        %1202 = vmatpush2.bf16.msra.mxu0 0
        %1203 = vmatprep.subr.bf16.mxu0 0
        %1204 = vmatpush2.bf16.msra.mxu0 0
        %1205 = vmatprep.mubr.bf16.mxu0 0
        %1206 = vmatmul.mubr.bf16.gmra.mxu0 %v1126
        %v1207 = vpop.f32.mrf.mxu0
        %v1208 = vadd.f32 0.0, %v1207
        %v1209 = vpop.f32.mrf.mxu0
        %v1210 = vpop.f32.mrf.mxu0
        %v1211 = vpop.f32.mrf.mxu0
        %1212 = vdwg.mxu0
        %1214 = vrot.lane.b32.xlu0 %v1208, 80
        %v1215 = vpop.permute.xlu0 %1214
        %v1217 = vadd.f32 %v387, %v1215
        %1218 = vmatprep.subr.bf16.mxu0 0
        %1219 = vmatpush1.bf16.msra.mxu0 0
        %1220 = vmatprep.subr.bf16.mxu0 0
        %1221 = vmatpush1.bf16.msra.mxu0 0
        %1222 = vmatprep.subr.bf16.mxu0 0
        %1223 = vmatpush1.bf16.msra.mxu0 0
        %1224 = vmatprep.subr.bf16.mxu0 0
        %1225 = vmatpush1.bf16.msra.mxu0 0
        %1226 = vmatprep.subr.bf16.mxu0 0
        %1227 = vmatpush1.bf16.msra.mxu0 0
        %1228 = vmatprep.subr.bf16.mxu0 0
        %1229 = vmatpush1.bf16.msra.mxu0 0
        %1230 = vmatprep.subr.bf16.mxu0 0
        %1231 = vmatpush1.bf16.msra.mxu0 0
        %1232 = vmatprep.subr.bf16.mxu0 0
        %1233 = vmatpush1.bf16.msra.mxu0 %v763
        %1234 = vmatprep.subr.bf16.mxu0 0
        %1235 = vmatpush2.bf16.msra.mxu0 0
        %1236 = vmatprep.subr.bf16.mxu0 0
        %1237 = vmatpush2.bf16.msra.mxu0 0
        %1238 = vmatprep.subr.bf16.mxu0 0
        %1239 = vmatpush2.bf16.msra.mxu0 0
        %1240 = vmatprep.subr.bf16.mxu0 0
        %1241 = vmatpush2.bf16.msra.mxu0 0
        %1242 = vmatprep.subr.bf16.mxu0 0
        %1243 = vmatpush2.bf16.msra.mxu0 0
        %1244 = vmatprep.subr.bf16.mxu0 0
        %1245 = vmatpush2.bf16.msra.mxu0 0
        %1246 = vmatprep.subr.bf16.mxu0 0
        %1247 = vmatpush2.bf16.msra.mxu0 0
        %1248 = vmatprep.subr.bf16.mxu0 0
        %1249 = vmatpush2.bf16.msra.mxu0 0
        %1250 = vmatprep.mubr.bf16.mxu0 0
        %1251 = vmatmul.mubr.bf16.gmra.mxu0 %v1126
        %v1252 = vpop.f32.mrf.mxu0
        %v1253 = vadd.f32 0.0, %v1252
        %v1254 = vpop.f32.mrf.mxu0
        %v1255 = vpop.f32.mrf.mxu0
        %v1256 = vpop.f32.mrf.mxu0
        %1257 = vdwg.mxu0
        %1259 = vrot.lane.b32.xlu0 %v1253, 96
        %v1260 = vpop.permute.xlu0 %1259
        %v1262 = vadd.f32 %v387, %v1260
        %1263 = vmatprep.subr.bf16.mxu0 0
        %1264 = vmatpush1.bf16.msra.mxu0 0
        %1265 = vmatprep.subr.bf16.mxu0 0
        %1266 = vmatpush1.bf16.msra.mxu0 0
        %1267 = vmatprep.subr.bf16.mxu0 0
        %1268 = vmatpush1.bf16.msra.mxu0 0
        %1269 = vmatprep.subr.bf16.mxu0 0
        %1270 = vmatpush1.bf16.msra.mxu0 0
        %1271 = vmatprep.subr.bf16.mxu0 0
        %1272 = vmatpush1.bf16.msra.mxu0 0
        %1273 = vmatprep.subr.bf16.mxu0 0
        %1274 = vmatpush1.bf16.msra.mxu0 0
        %1275 = vmatprep.subr.bf16.mxu0 0
        %1276 = vmatpush1.bf16.msra.mxu0 0
        %1277 = vmatprep.subr.bf16.mxu0 0
        %1278 = vmatpush1.bf16.msra.mxu0 %v817
        %1279 = vmatprep.subr.bf16.mxu0 0
        %1280 = vmatpush2.bf16.msra.mxu0 0
        %1281 = vmatprep.subr.bf16.mxu0 0
        %1282 = vmatpush2.bf16.msra.mxu0 0
        %1283 = vmatprep.subr.bf16.mxu0 0
        %1284 = vmatpush2.bf16.msra.mxu0 0
        %1285 = vmatprep.subr.bf16.mxu0 0
        %1286 = vmatpush2.bf16.msra.mxu0 0
        %1287 = vmatprep.subr.bf16.mxu0 0
        %1288 = vmatpush2.bf16.msra.mxu0 0
        %1289 = vmatprep.subr.bf16.mxu0 0
        %1290 = vmatpush2.bf16.msra.mxu0 0
        %1291 = vmatprep.subr.bf16.mxu0 0
        %1292 = vmatpush2.bf16.msra.mxu0 0
        %1293 = vmatprep.subr.bf16.mxu0 0
        %1294 = vmatpush2.bf16.msra.mxu0 0
        %1295 = vmatprep.mubr.bf16.mxu0 0
        %1296 = vmatmul.mubr.bf16.gmra.mxu0 %v1126
        %v1297 = vpop.f32.mrf.mxu0
        %v1298 = vadd.f32 0.0, %v1297
        %v1299 = vpop.f32.mrf.mxu0
        %v1300 = vpop.f32.mrf.mxu0
        %v1301 = vpop.f32.mrf.mxu0
        %1302 = vdwg.mxu0
        %1304 = vrot.lane.b32.xlu0 %v1298, 112
        %v1305 = vpop.permute.xlu0 %1304
        %v1307 = vadd.f32 %v387, %v1305
        %v1308 = vxor.u32 %v1172, 2147483648
        %v1309 = vmul.f32 %v1308, 1.442695
        %v1310 = vpow.pop %v1309
        %v1311 = vadd.f32 %v1310, 1.0
        %v1312 = vrcp.pop %v1311
        %v1313 = vmul.f32 1.0, %v1312
        %v1314 = vxor.u32 %v1217, 2147483648
        %v1315 = vmul.f32 %v1314, 1.442695
        %v1316 = vpow.pop %v1315
        %v1317 = vadd.f32 %v1316, 1.0
        %v1318 = vrcp.pop %v1317
        %v1319 = vmul.f32 1.0, %v1318
        %v1320 = vtanh.pop %v1262
        %v1321 = vxor.u32 %v1307, 2147483648
        %v1322 = vmul.f32 %v1321, 1.442695
        %v1323 = vpow.pop %v1322
        %v1324 = vadd.f32 %v1323, 1.0
        %v1325 = vrcp.pop %v1324
        %v1326 = vmul.f32 1.0, %v1325
        %v1327 = vmul.f32 %v1319, %v893
        %1329 = vrot.lane.b32.xlu0 %v1320, 96
        %v1330 = vpop.permute.xlu0 %1329
        %v1332 = vmul.f32 %v1313, %v1330
        %1334 = vrot.lane.b32.xlu0 %v1332, 16
        %v1335 = vpop.permute.xlu0 %1334
        %v1337 = vadd.f32 %v1327, %v1335
        %v1338 = vtanh.pop %v1337
        %1340 = vrot.lane.b32.xlu0 %v1338, 32
        %v1341 = vpop.permute.xlu0 %1340
        %v1343 = vmul.f32 %v1326, %v1341
        %v1344 = vadd.f32 %v900, %v1120
        %v1345 = vadd.f32 %v901, %v1343
        %v1346 = vpack.c.bf16 %v1120, %v1120
        %1348 = vrot.lane.b32.xlu0 %v1346, 80
        %v1349 = vpop.permute.xlu0 %1348
        %v1351 = vsel %vm405, %v1349, 0
        %1353 = vmatprep.subr.bf16.mxu0 0
        %1354 = vmatpush1.bf16.msra.mxu0 0
        %1355 = vmatprep.subr.bf16.mxu0 0
        %1356 = vmatpush1.bf16.msra.mxu0 0
        %1357 = vmatprep.subr.bf16.mxu0 0
        %1358 = vmatpush1.bf16.msra.mxu0 0
        %1359 = vmatprep.subr.bf16.mxu0 0
        %1360 = vmatpush1.bf16.msra.mxu0 0
        %1361 = vmatprep.subr.bf16.mxu0 0
        %1362 = vmatpush1.bf16.msra.mxu0 0
        %1363 = vmatprep.subr.bf16.mxu0 0
        %1364 = vmatpush1.bf16.msra.mxu0 0
        %1365 = vmatprep.subr.bf16.mxu0 0
        %1366 = vmatpush1.bf16.msra.mxu0 0
        %1367 = vmatprep.subr.bf16.mxu0 0
        %1368 = vmatpush1.bf16.msra.mxu0 %v403
        %1369 = vmatprep.subr.bf16.mxu0 0
        %1370 = vmatpush2.bf16.msra.mxu0 0
        %1371 = vmatprep.subr.bf16.mxu0 0
        %1372 = vmatpush2.bf16.msra.mxu0 0
        %1373 = vmatprep.subr.bf16.mxu0 0
        %1374 = vmatpush2.bf16.msra.mxu0 0
        %1375 = vmatprep.subr.bf16.mxu0 0
        %1376 = vmatpush2.bf16.msra.mxu0 0
        %1377 = vmatprep.subr.bf16.mxu0 0
        %1378 = vmatpush2.bf16.msra.mxu0 0
        %1379 = vmatprep.subr.bf16.mxu0 0
        %1380 = vmatpush2.bf16.msra.mxu0 0
        %1381 = vmatprep.subr.bf16.mxu0 0
        %1382 = vmatpush2.bf16.msra.mxu0 0
        %1383 = vmatprep.subr.bf16.mxu0 0
        %1384 = vmatpush2.bf16.msra.mxu0 0
        %1385 = vmatprep.mubr.bf16.mxu0 0
        %1386 = vmatmul.mubr.bf16.gmra.mxu0 %v1351
        %v1387 = vpop.f32.mrf.mxu0
        %v1388 = vadd.f32 0.0, %v1387
        %v1389 = vpop.f32.mrf.mxu0
        %v1390 = vpop.f32.mrf.mxu0
        %v1391 = vpop.f32.mrf.mxu0
        %1392 = vdwg.mxu0
        %v1393 = vadd.f32 %v392, %v1388
        %1394 = vmatprep.subr.bf16.mxu0 0
        %1395 = vmatpush1.bf16.msra.mxu0 0
        %1396 = vmatprep.subr.bf16.mxu0 0
        %1397 = vmatpush1.bf16.msra.mxu0 0
        %1398 = vmatprep.subr.bf16.mxu0 0
        %1399 = vmatpush1.bf16.msra.mxu0 0
        %1400 = vmatprep.subr.bf16.mxu0 0
        %1401 = vmatpush1.bf16.msra.mxu0 0
        %1402 = vmatprep.subr.bf16.mxu0 0
        %1403 = vmatpush1.bf16.msra.mxu0 0
        %1404 = vmatprep.subr.bf16.mxu0 0
        %1405 = vmatpush1.bf16.msra.mxu0 0
        %1406 = vmatprep.subr.bf16.mxu0 0
        %1407 = vmatpush1.bf16.msra.mxu0 0
        %1408 = vmatprep.subr.bf16.mxu0 0
        %1409 = vmatpush1.bf16.msra.mxu0 %v457
        %1410 = vmatprep.subr.bf16.mxu0 0
        %1411 = vmatpush2.bf16.msra.mxu0 0
        %1412 = vmatprep.subr.bf16.mxu0 0
        %1413 = vmatpush2.bf16.msra.mxu0 0
        %1414 = vmatprep.subr.bf16.mxu0 0
        %1415 = vmatpush2.bf16.msra.mxu0 0
        %1416 = vmatprep.subr.bf16.mxu0 0
        %1417 = vmatpush2.bf16.msra.mxu0 0
        %1418 = vmatprep.subr.bf16.mxu0 0
        %1419 = vmatpush2.bf16.msra.mxu0 0
        %1420 = vmatprep.subr.bf16.mxu0 0
        %1421 = vmatpush2.bf16.msra.mxu0 0
        %1422 = vmatprep.subr.bf16.mxu0 0
        %1423 = vmatpush2.bf16.msra.mxu0 0
        %1424 = vmatprep.subr.bf16.mxu0 0
        %1425 = vmatpush2.bf16.msra.mxu0 0
        %1426 = vmatprep.mubr.bf16.mxu0 0
        %1427 = vmatmul.mubr.bf16.gmra.mxu0 %v1351
        %v1428 = vpop.f32.mrf.mxu0
        %v1429 = vadd.f32 0.0, %v1428
        %v1430 = vpop.f32.mrf.mxu0
        %v1431 = vpop.f32.mrf.mxu0
        %v1432 = vpop.f32.mrf.mxu0
        %1433 = vdwg.mxu0
        %1435 = vrot.lane.b32.xlu0 %v1429, 16
        %v1436 = vpop.permute.xlu0 %1435
        %v1438 = vadd.f32 %v392, %v1436
        %1439 = vmatprep.subr.bf16.mxu0 0
        %1440 = vmatpush1.bf16.msra.mxu0 0
        %1441 = vmatprep.subr.bf16.mxu0 0
        %1442 = vmatpush1.bf16.msra.mxu0 0
        %1443 = vmatprep.subr.bf16.mxu0 0
        %1444 = vmatpush1.bf16.msra.mxu0 0
        %1445 = vmatprep.subr.bf16.mxu0 0
        %1446 = vmatpush1.bf16.msra.mxu0 0
        %1447 = vmatprep.subr.bf16.mxu0 0
        %1448 = vmatpush1.bf16.msra.mxu0 0
        %1449 = vmatprep.subr.bf16.mxu0 0
        %1450 = vmatpush1.bf16.msra.mxu0 0
        %1451 = vmatprep.subr.bf16.mxu0 0
        %1452 = vmatpush1.bf16.msra.mxu0 0
        %1453 = vmatprep.subr.bf16.mxu0 0
        %1454 = vmatpush1.bf16.msra.mxu0 %v511
        %1455 = vmatprep.subr.bf16.mxu0 0
        %1456 = vmatpush2.bf16.msra.mxu0 0
        %1457 = vmatprep.subr.bf16.mxu0 0
        %1458 = vmatpush2.bf16.msra.mxu0 0
        %1459 = vmatprep.subr.bf16.mxu0 0
        %1460 = vmatpush2.bf16.msra.mxu0 0
        %1461 = vmatprep.subr.bf16.mxu0 0
        %1462 = vmatpush2.bf16.msra.mxu0 0
        %1463 = vmatprep.subr.bf16.mxu0 0
        %1464 = vmatpush2.bf16.msra.mxu0 0
        %1465 = vmatprep.subr.bf16.mxu0 0
        %1466 = vmatpush2.bf16.msra.mxu0 0
        %1467 = vmatprep.subr.bf16.mxu0 0
        %1468 = vmatpush2.bf16.msra.mxu0 0
        %1469 = vmatprep.subr.bf16.mxu0 0
        %1470 = vmatpush2.bf16.msra.mxu0 0
        %1471 = vmatprep.mubr.bf16.mxu0 0
        %1472 = vmatmul.mubr.bf16.gmra.mxu0 %v1351
        %v1473 = vpop.f32.mrf.mxu0
        %v1474 = vadd.f32 0.0, %v1473
        %v1475 = vpop.f32.mrf.mxu0
        %v1476 = vpop.f32.mrf.mxu0
        %v1477 = vpop.f32.mrf.mxu0
        %1478 = vdwg.mxu0
        %1480 = vrot.lane.b32.xlu0 %v1474, 32
        %v1481 = vpop.permute.xlu0 %1480
        %v1483 = vadd.f32 %v392, %v1481
        %1484 = vmatprep.subr.bf16.mxu0 0
        %1485 = vmatpush1.bf16.msra.mxu0 0
        %1486 = vmatprep.subr.bf16.mxu0 0
        %1487 = vmatpush1.bf16.msra.mxu0 0
        %1488 = vmatprep.subr.bf16.mxu0 0
        %1489 = vmatpush1.bf16.msra.mxu0 0
        %1490 = vmatprep.subr.bf16.mxu0 0
        %1491 = vmatpush1.bf16.msra.mxu0 0
        %1492 = vmatprep.subr.bf16.mxu0 0
        %1493 = vmatpush1.bf16.msra.mxu0 0
        %1494 = vmatprep.subr.bf16.mxu0 0
        %1495 = vmatpush1.bf16.msra.mxu0 0
        %1496 = vmatprep.subr.bf16.mxu0 0
        %1497 = vmatpush1.bf16.msra.mxu0 0
        %1498 = vmatprep.subr.bf16.mxu0 0
        %1499 = vmatpush1.bf16.msra.mxu0 %v565
        %1500 = vmatprep.subr.bf16.mxu0 0
        %1501 = vmatpush2.bf16.msra.mxu0 0
        %1502 = vmatprep.subr.bf16.mxu0 0
        %1503 = vmatpush2.bf16.msra.mxu0 0
        %1504 = vmatprep.subr.bf16.mxu0 0
        %1505 = vmatpush2.bf16.msra.mxu0 0
        %1506 = vmatprep.subr.bf16.mxu0 0
        %1507 = vmatpush2.bf16.msra.mxu0 0
        %1508 = vmatprep.subr.bf16.mxu0 0
        %1509 = vmatpush2.bf16.msra.mxu0 0
        %1510 = vmatprep.subr.bf16.mxu0 0
        %1511 = vmatpush2.bf16.msra.mxu0 0
        %1512 = vmatprep.subr.bf16.mxu0 0
        %1513 = vmatpush2.bf16.msra.mxu0 0
        %1514 = vmatprep.subr.bf16.mxu0 0
        %1515 = vmatpush2.bf16.msra.mxu0 0
        %1516 = vmatprep.mubr.bf16.mxu0 0
        %1517 = vmatmul.mubr.bf16.gmra.mxu0 %v1351
        %v1518 = vpop.f32.mrf.mxu0
        %v1519 = vadd.f32 0.0, %v1518
        %v1520 = vpop.f32.mrf.mxu0
        %v1521 = vpop.f32.mrf.mxu0
        %v1522 = vpop.f32.mrf.mxu0
        %1523 = vdwg.mxu0
        %1525 = vrot.lane.b32.xlu0 %v1519, 48
        %v1526 = vpop.permute.xlu0 %1525
        %v1528 = vadd.f32 %v392, %v1526
        %v1529 = vxor.u32 %v1393, 2147483648
        %v1530 = vmul.f32 %v1529, 1.442695
        %v1531 = vpow.pop %v1530
        %v1532 = vadd.f32 %v1531, 1.0
        %v1533 = vrcp.pop %v1532
        %v1534 = vmul.f32 1.0, %v1533
        %v1535 = vxor.u32 %v1438, 2147483648
        %v1536 = vmul.f32 %v1535, 1.442695
        %v1537 = vpow.pop %v1536
        %v1538 = vadd.f32 %v1537, 1.0
        %v1539 = vrcp.pop %v1538
        %v1540 = vmul.f32 1.0, %v1539
        %v1541 = vtanh.pop %v1483
        %v1542 = vxor.u32 %v1528, 2147483648
        %v1543 = vmul.f32 %v1542, 1.442695
        %v1544 = vpow.pop %v1543
        %v1545 = vadd.f32 %v1544, 1.0
        %v1546 = vrcp.pop %v1545
        %v1547 = vmul.f32 1.0, %v1546
        %v1548 = vmul.f32 %v1540, %v1114
        %1550 = vrot.lane.b32.xlu0 %v1541, 96
        %v1551 = vpop.permute.xlu0 %1550
        %v1553 = vmul.f32 %v1534, %v1551
        %1555 = vrot.lane.b32.xlu0 %v1553, 16
        %v1556 = vpop.permute.xlu0 %1555
        %v1558 = vadd.f32 %v1548, %v1556
        %v1559 = vtanh.pop %v1558
        %1561 = vrot.lane.b32.xlu0 %v1559, 32
        %v1562 = vpop.permute.xlu0 %1561
        %v1564 = vmul.f32 %v1547, %v1562
        %v1565 = vpack.c.bf16 %v1343, %v1343
        %1567 = vrot.lane.b32.xlu0 %v1565, 16
        %v1568 = vpop.permute.xlu0 %1567
        %v1570 = vsel %vm405, %v1568, 0
        %1572 = vmatprep.subr.bf16.mxu0 0
        %1573 = vmatpush1.bf16.msra.mxu0 0
        %1574 = vmatprep.subr.bf16.mxu0 0
        %1575 = vmatpush1.bf16.msra.mxu0 0
        %1576 = vmatprep.subr.bf16.mxu0 0
        %1577 = vmatpush1.bf16.msra.mxu0 0
        %1578 = vmatprep.subr.bf16.mxu0 0
        %1579 = vmatpush1.bf16.msra.mxu0 0
        %1580 = vmatprep.subr.bf16.mxu0 0
        %1581 = vmatpush1.bf16.msra.mxu0 0
        %1582 = vmatprep.subr.bf16.mxu0 0
        %1583 = vmatpush1.bf16.msra.mxu0 0
        %1584 = vmatprep.subr.bf16.mxu0 0
        %1585 = vmatpush1.bf16.msra.mxu0 0
        %1586 = vmatprep.subr.bf16.mxu0 0
        %1587 = vmatpush1.bf16.msra.mxu0 %v655
        %1588 = vmatprep.subr.bf16.mxu0 0
        %1589 = vmatpush2.bf16.msra.mxu0 0
        %1590 = vmatprep.subr.bf16.mxu0 0
        %1591 = vmatpush2.bf16.msra.mxu0 0
        %1592 = vmatprep.subr.bf16.mxu0 0
        %1593 = vmatpush2.bf16.msra.mxu0 0
        %1594 = vmatprep.subr.bf16.mxu0 0
        %1595 = vmatpush2.bf16.msra.mxu0 0
        %1596 = vmatprep.subr.bf16.mxu0 0
        %1597 = vmatpush2.bf16.msra.mxu0 0
        %1598 = vmatprep.subr.bf16.mxu0 0
        %1599 = vmatpush2.bf16.msra.mxu0 0
        %1600 = vmatprep.subr.bf16.mxu0 0
        %1601 = vmatpush2.bf16.msra.mxu0 0
        %1602 = vmatprep.subr.bf16.mxu0 0
        %1603 = vmatpush2.bf16.msra.mxu0 0
        %1604 = vmatprep.mubr.bf16.mxu0 0
        %1605 = vmatmul.mubr.bf16.gmra.mxu0 %v1570
        %v1606 = vpop.f32.mrf.mxu0
        %v1607 = vadd.f32 0.0, %v1606
        %v1608 = vpop.f32.mrf.mxu0
        %v1609 = vpop.f32.mrf.mxu0
        %v1610 = vpop.f32.mrf.mxu0
        %1611 = vdwg.mxu0
        %1613 = vrot.lane.b32.xlu0 %v1607, 64
        %v1614 = vpop.permute.xlu0 %1613
        %v1616 = vadd.f32 %v384, %v1614
        %1617 = vmatprep.subr.bf16.mxu0 0
        %1618 = vmatpush1.bf16.msra.mxu0 0
        %1619 = vmatprep.subr.bf16.mxu0 0
        %1620 = vmatpush1.bf16.msra.mxu0 0
        %1621 = vmatprep.subr.bf16.mxu0 0
        %1622 = vmatpush1.bf16.msra.mxu0 0
        %1623 = vmatprep.subr.bf16.mxu0 0
        %1624 = vmatpush1.bf16.msra.mxu0 0
        %1625 = vmatprep.subr.bf16.mxu0 0
        %1626 = vmatpush1.bf16.msra.mxu0 0
        %1627 = vmatprep.subr.bf16.mxu0 0
        %1628 = vmatpush1.bf16.msra.mxu0 0
        %1629 = vmatprep.subr.bf16.mxu0 0
        %1630 = vmatpush1.bf16.msra.mxu0 0
        %1631 = vmatprep.subr.bf16.mxu0 0
        %1632 = vmatpush1.bf16.msra.mxu0 %v709
        %1633 = vmatprep.subr.bf16.mxu0 0
        %1634 = vmatpush2.bf16.msra.mxu0 0
        %1635 = vmatprep.subr.bf16.mxu0 0
        %1636 = vmatpush2.bf16.msra.mxu0 0
        %1637 = vmatprep.subr.bf16.mxu0 0
        %1638 = vmatpush2.bf16.msra.mxu0 0
        %1639 = vmatprep.subr.bf16.mxu0 0
        %1640 = vmatpush2.bf16.msra.mxu0 0
        %1641 = vmatprep.subr.bf16.mxu0 0
        %1642 = vmatpush2.bf16.msra.mxu0 0
        %1643 = vmatprep.subr.bf16.mxu0 0
        %1644 = vmatpush2.bf16.msra.mxu0 0
        %1645 = vmatprep.subr.bf16.mxu0 0
        %1646 = vmatpush2.bf16.msra.mxu0 0
        %1647 = vmatprep.subr.bf16.mxu0 0
        %1648 = vmatpush2.bf16.msra.mxu0 0
        %1649 = vmatprep.mubr.bf16.mxu0 0
        %1650 = vmatmul.mubr.bf16.gmra.mxu0 %v1570
        %v1651 = vpop.f32.mrf.mxu0
        %v1652 = vadd.f32 0.0, %v1651
        %v1653 = vpop.f32.mrf.mxu0
        %v1654 = vpop.f32.mrf.mxu0
        %v1655 = vpop.f32.mrf.mxu0
        %1656 = vdwg.mxu0
        %1658 = vrot.lane.b32.xlu0 %v1652, 80
        %v1659 = vpop.permute.xlu0 %1658
        %v1661 = vadd.f32 %v384, %v1659
        %1662 = vmatprep.subr.bf16.mxu0 0
        %1663 = vmatpush1.bf16.msra.mxu0 0
        %1664 = vmatprep.subr.bf16.mxu0 0
        %1665 = vmatpush1.bf16.msra.mxu0 0
        %1666 = vmatprep.subr.bf16.mxu0 0
        %1667 = vmatpush1.bf16.msra.mxu0 0
        %1668 = vmatprep.subr.bf16.mxu0 0
        %1669 = vmatpush1.bf16.msra.mxu0 0
        %1670 = vmatprep.subr.bf16.mxu0 0
        %1671 = vmatpush1.bf16.msra.mxu0 0
        %1672 = vmatprep.subr.bf16.mxu0 0
        %1673 = vmatpush1.bf16.msra.mxu0 0
        %1674 = vmatprep.subr.bf16.mxu0 0
        %1675 = vmatpush1.bf16.msra.mxu0 0
        %1676 = vmatprep.subr.bf16.mxu0 0
        %1677 = vmatpush1.bf16.msra.mxu0 %v763
        %1678 = vmatprep.subr.bf16.mxu0 0
        %1679 = vmatpush2.bf16.msra.mxu0 0
        %1680 = vmatprep.subr.bf16.mxu0 0
        %1681 = vmatpush2.bf16.msra.mxu0 0
        %1682 = vmatprep.subr.bf16.mxu0 0
        %1683 = vmatpush2.bf16.msra.mxu0 0
        %1684 = vmatprep.subr.bf16.mxu0 0
        %1685 = vmatpush2.bf16.msra.mxu0 0
        %1686 = vmatprep.subr.bf16.mxu0 0
        %1687 = vmatpush2.bf16.msra.mxu0 0
        %1688 = vmatprep.subr.bf16.mxu0 0
        %1689 = vmatpush2.bf16.msra.mxu0 0
        %1690 = vmatprep.subr.bf16.mxu0 0
        %1691 = vmatpush2.bf16.msra.mxu0 0
        %1692 = vmatprep.subr.bf16.mxu0 0
        %1693 = vmatpush2.bf16.msra.mxu0 0
        %1694 = vmatprep.mubr.bf16.mxu0 0
        %1695 = vmatmul.mubr.bf16.gmra.mxu0 %v1570
        %v1696 = vpop.f32.mrf.mxu0
        %v1697 = vadd.f32 0.0, %v1696
        %v1698 = vpop.f32.mrf.mxu0
        %v1699 = vpop.f32.mrf.mxu0
        %v1700 = vpop.f32.mrf.mxu0
        %1701 = vdwg.mxu0
        %1703 = vrot.lane.b32.xlu0 %v1697, 96
        %v1704 = vpop.permute.xlu0 %1703
        %v1706 = vadd.f32 %v384, %v1704
        %1707 = vmatprep.subr.bf16.mxu0 0
        %1708 = vmatpush1.bf16.msra.mxu0 0
        %1709 = vmatprep.subr.bf16.mxu0 0
        %1710 = vmatpush1.bf16.msra.mxu0 0
        %1711 = vmatprep.subr.bf16.mxu0 0
        %1712 = vmatpush1.bf16.msra.mxu0 0
        %1713 = vmatprep.subr.bf16.mxu0 0
        %1714 = vmatpush1.bf16.msra.mxu0 0
        %1715 = vmatprep.subr.bf16.mxu0 0
        %1716 = vmatpush1.bf16.msra.mxu0 0
        %1717 = vmatprep.subr.bf16.mxu0 0
        %1718 = vmatpush1.bf16.msra.mxu0 0
        %1719 = vmatprep.subr.bf16.mxu0 0
        %1720 = vmatpush1.bf16.msra.mxu0 0
        %1721 = vmatprep.subr.bf16.mxu0 0
        %1722 = vmatpush1.bf16.msra.mxu0 %v817
        %1723 = vmatprep.subr.bf16.mxu0 0
        %1724 = vmatpush2.bf16.msra.mxu0 0
        %1725 = vmatprep.subr.bf16.mxu0 0
        %1726 = vmatpush2.bf16.msra.mxu0 0
        %1727 = vmatprep.subr.bf16.mxu0 0
        %1728 = vmatpush2.bf16.msra.mxu0 0
        %1729 = vmatprep.subr.bf16.mxu0 0
        %1730 = vmatpush2.bf16.msra.mxu0 0
        %1731 = vmatprep.subr.bf16.mxu0 0
        %1732 = vmatpush2.bf16.msra.mxu0 0
        %1733 = vmatprep.subr.bf16.mxu0 0
        %1734 = vmatpush2.bf16.msra.mxu0 0
        %1735 = vmatprep.subr.bf16.mxu0 0
        %1736 = vmatpush2.bf16.msra.mxu0 0
        %1737 = vmatprep.subr.bf16.mxu0 0
        %1738 = vmatpush2.bf16.msra.mxu0 0
        %1739 = vmatprep.mubr.bf16.mxu0 0
        %1740 = vmatmul.mubr.bf16.gmra.mxu0 %v1570
        %v1741 = vpop.f32.mrf.mxu0
        %v1742 = vadd.f32 0.0, %v1741
        %v1743 = vpop.f32.mrf.mxu0
        %v1744 = vpop.f32.mrf.mxu0
        %v1745 = vpop.f32.mrf.mxu0
        %1746 = vdwg.mxu0
        %1748 = vrot.lane.b32.xlu0 %v1742, 112
        %v1749 = vpop.permute.xlu0 %1748
        %v1751 = vadd.f32 %v384, %v1749
        %v1752 = vxor.u32 %v1616, 2147483648
        %v1753 = vmul.f32 %v1752, 1.442695
        %v1754 = vpow.pop %v1753
        %v1755 = vadd.f32 %v1754, 1.0
        %v1756 = vrcp.pop %v1755
        %v1757 = vmul.f32 1.0, %v1756
        %v1758 = vxor.u32 %v1661, 2147483648
        %v1759 = vmul.f32 %v1758, 1.442695
        %v1760 = vpow.pop %v1759
        %v1761 = vadd.f32 %v1760, 1.0
        %v1762 = vrcp.pop %v1761
        %v1763 = vmul.f32 1.0, %v1762
        %v1764 = vtanh.pop %v1706
        %v1765 = vxor.u32 %v1751, 2147483648
        %v1766 = vmul.f32 %v1765, 1.442695
        %v1767 = vpow.pop %v1766
        %v1768 = vadd.f32 %v1767, 1.0
        %v1769 = vrcp.pop %v1768
        %v1770 = vmul.f32 1.0, %v1769
        %v1771 = vmul.f32 %v1763, %v1337
        %1773 = vrot.lane.b32.xlu0 %v1764, 96
        %v1774 = vpop.permute.xlu0 %1773
        %v1776 = vmul.f32 %v1757, %v1774
        %1778 = vrot.lane.b32.xlu0 %v1776, 16
        %v1779 = vpop.permute.xlu0 %1778
        %v1781 = vadd.f32 %v1771, %v1779
        %v1782 = vtanh.pop %v1781
        %1784 = vrot.lane.b32.xlu0 %v1782, 32
        %v1785 = vpop.permute.xlu0 %1784
        %v1787 = vmul.f32 %v1770, %v1785
        %v1788 = vadd.f32 %v1344, %v1564
        %v1789 = vadd.f32 %v1345, %v1787
        %v1790 = vmul.f32 %v1788, 0.33333334
        %v1791 = vmul.f32 %v1789, 0.33333334
        %1793 = vrot.lane.b32.xlu0 %v1790, 80
        %v1794 = vpop.permute.xlu0 %1793
        %1797 = vrot.lane.b32.xlu0 %v1791, 32
        %v1798 = vpop.permute.xlu0 %1797
        %v1800 = vsel %vm405, %v1794, %v1798
        %1801 = vst.msk [vmem:[%s303] sm:$0xff] %vm342, %v1800
        %s1802 = sand.u32 %s136, 1
        %s1803 = scalar_lea.sflag [#allocation4], %s1802
        %s1804 = sand.u32 %s136, 1
        %s1805 = smul.addr %s1804, 8
        %s1806 = scalar_lea.vmem [#allocation8], %s1805
        // Predicated region
        $region49: #{tpu_custom_call.1} parent=35 // pred_check
          %p1807 = pneg %p146
        $region50: #{tpu_custom_call.1} parent=35 // pred_check_branch
          %1809 = sbr.rel (%p1807) target = $region52
        $region51: #{tpu_custom_call.1} parent=35 // pred_region
          %s1811 = ssub.s32 128, 128
          %1812 = vsyncadd %s1803, %s1811
          %s1813 = smul.addr %s24, 128
          %s1814 = scalar_lea.hbm %s4, %s1813
          %s1816 = sshll.u32 %s1806, 4
          %s1817 = int_to_ptr.vmem [resolvable:$true] %s1816
          %1819 = dma.vmem_to_hbm [thread:$0]  %s1817, 128, %s1814, %s1803
        $region52: #{tpu_custom_call.1} parent=35 // pred_fallthru
          _
      $region36: #{tpu_custom_call.1} parent=5 // pred_fallthru
        _
      %p1820 = scmp.le.s32.totalorder 2, %s19
      // Predicated region
      $region53: #{tpu_custom_call.1} parent=5 // pred_check
        %p1821 = pneg %p1820
      $region54: #{tpu_custom_call.1} parent=5 // pred_check_branch
        %1823 = sbr.rel (%p1821) target = $region56
      $region55: #{tpu_custom_call.1} parent=5 // pred_region
        %s1824 = ssub.s32 %s19, 2
        // Predicated region
        $region57: #{tpu_custom_call.1} parent=55 // pred_check
          %p1825 = pneg %p152
        $region58: #{tpu_custom_call.1} parent=55 // pred_check_branch
          %1827 = sbr.rel (%p1825) target = $region60
        $region59: #{tpu_custom_call.1} parent=55 // pred_region
          %s1828 = sand.u32 %s137, 1
          %s1829 = scalar_lea.sflag [#allocation4], %s1828
          %s1830 = sand.u32 %s137, 1
          %s1831 = smul.addr %s1830, 8
          %s1832 = scalar_lea.vmem [#allocation8], %s1831
          %1833 = dma.done %s1829, 128
        $region60: #{tpu_custom_call.1} parent=55 // pred_fallthru
          _
      $region56: #{tpu_custom_call.1} parent=5 // pred_fallthru
        _
    $region6: #{tpu_custom_call.1} parent=1 // loop_footer
      %s23 = sadd.s32 1, %s19
    $region7: #{tpu_custom_call.1} parent=1 // loop_footer_branch
      %18 = sbr.rel target = $region3
    $region8: #{tpu_custom_call.1} parent=1 // loop_exit
      _
    %1834 = vsyncpa [#allocation3], 1
    %s1835 = scalar_lea.sflag [#allocation3], 1
    %1836 = vsyncpa %s1835, 1
    %1837 = vsyncpa [#allocation6], 1
    %s1838 = scalar_lea.sflag [#allocation6], 1
    %1839 = vsyncpa %s1838, 1
    %1840 = vsyncpa [#allocation4], 1
    %s1841 = scalar_lea.sflag [#allocation4], 1
    %1842 = vsyncpa %s1841, 1

</llo_original>
